<compile_context>
chip_gen: v7x
topology: tpu7x:2x2x1
jax: 0.10.0
libtpu: 0.0.40
codegen_flags: <defaults>
</compile_context>

<pallas_src>
import functools

import jax
import jax.numpy as jnp
from jax.experimental import pallas as pl
from jax.experimental.pallas import tpu as pltpu

LEAKY_SLOPE = 0.01   # nn.LeakyReLU default
LN_EPS = 1e-5        # nn.LayerNorm default
LANES = 128


def _round_up(x, m):
    return ((x + m - 1) // m) * m


def _linear_leaky_ln(x_bf16, w_ref, b_ref, g_ref, be_ref):
    """Linear (bf16 MXU, f32 acc) -> LeakyReLU -> LayerNorm on one row-chunk."""
    h = jnp.dot(x_bf16, w_ref[...], preferred_element_type=jnp.float32) + b_ref[...]
    h = jnp.where(h > 0, h, LEAKY_SLOPE * h)                     # VPU
    # One-pass LN stats: E[h] and E[h^2] (single pair of XLU reductions).
    mu = jnp.mean(h, axis=-1, keepdims=True)
    ms = jnp.mean(h * h, axis=-1, keepdims=True)
    var = jnp.maximum(ms - mu * mu, 0.0)                         # clamp fp noise
    h = (h - mu) * jax.lax.rsqrt(var + LN_EPS)                   # EUP rsqrt
    return h * g_ref[...] + be_ref[...]


def disc_kernel(x_ref,
                w1_ref, b1_ref, g1_ref, be1_ref,
                w2_ref, b2_ref, g2_ref, be2_ref,
                wo_ref, bo_ref,
                o_ref, *, n_chunks):
    rows = x_ref.shape[0] // n_chunks
    # Static (unrolled) chunk loop: gives the LLO scheduler independent
    # matmul / LayerNorm chains so MXU work overlaps VPU/XLU/EUP work.
    for c in range(n_chunks):
        sl = slice(c * rows, (c + 1) * rows)
        x = x_ref[sl, :].astype(jnp.bfloat16)            # in-kernel f32 -> bf16
        h = _linear_leaky_ln(x, w1_ref, b1_ref, g1_ref, be1_ref)
        h = _linear_leaky_ln(h.astype(jnp.bfloat16), w2_ref, b2_ref, g2_ref, be2_ref)
        out = jnp.dot(h.astype(jnp.bfloat16), wo_ref[...],
                      preferred_element_type=jnp.float32) + bo_ref[...]
        o_ref[sl, :] = out.astype(o_ref.dtype)


def prepare_params(params):
    """One-time parameter preparation. Call once; reuse across forward calls.

    - matmul weights cast to bf16 (MXU path, f32 accumulation)
    - output layer padded up to a multiple of 128 lanes (lane-dense stores)
    - biases / LN params kept in f32, shaped (1, d) for broadcasting
    Returns (prepared_dict, n_cls).
    """
    d_model, n_cls = params["wo"].shape
    n_out_pad = _round_up(max(n_cls, LANES), LANES)
    f32 = lambda a: a.reshape(1, -1).astype(jnp.float32)
    prepared = {
        "w1": params["w1"].astype(jnp.bfloat16),
        "b1": f32(params["b1"]), "g1": f32(params["g1"]), "be1": f32(params["be1"]),
        "w2": params["w2"].astype(jnp.bfloat16),
        "b2": f32(params["b2"]), "g2": f32(params["g2"]), "be2": f32(params["be2"]),
        "wo": jnp.zeros((d_model, n_out_pad), jnp.bfloat16)
                 .at[:, :n_cls].set(params["wo"].astype(jnp.bfloat16)),
        "bo": jnp.zeros((1, n_out_pad), jnp.float32)
                 .at[:, :n_cls].set(params["bo"].reshape(1, -1).astype(jnp.float32)),
    }
    return prepared, n_cls


def adversarial_discriminator(x, prepared, n_cls, *, block_b=None):
    """Forward pass. x: [batch, d_model] float32; prepared: from prepare_params."""
    batch, d_model = x.shape
    n_out_pad = prepared["wo"].shape[1]

    # --- batch tiling --------------------------------------------------------
    # Keep the grid at >= 2 steps so the "parallel" axis can shard across the
    # two TensorCores of a v7x chip; cap the tile for large d_model so
    # activations + weights fit v7x's 64 MiB VMEM.
    if block_b is None:
        cap = 512 if d_model < 2048 else 256
        block_b = min(cap, _round_up(max(1, -(-batch // 2)), 8))
    block_b = max(8, _round_up(block_b, 8))
    batch_pad = _round_up(batch, block_b)
    grid = (batch_pad // block_b,)

    x_p = x if batch_pad == batch else jnp.pad(x, ((0, batch_pad - batch), (0, 0)))

    # --- in-kernel row sub-chunking (MXU / VPU overlap) -----------------------
    n_chunks = 1
    for c in (4, 2):
        if block_b % (8 * c) == 0:
            n_chunks = c
            break

    # --- VMEM budgeting -------------------------------------------------------
    weight_bytes = (2 * d_model * d_model + d_model * n_out_pad) * 2   # bf16
    # Single-buffer the grid-invariant operands when double-buffering them would
    # dominate the budget (matters on v7x at d_model >= ~1536-2048).
    single_buffer = (2 * weight_bytes) > (16 << 20) and hasattr(pl, "Buffered")
    wbuf = weight_bytes * (1 if single_buffer else 2)
    xbuf = 2 * block_b * d_model * 4                   # f32 input, double-buffered
    obuf = 2 * block_b * n_out_pad * 2                 # bf16 output, double-buffered
    act = 4 * (block_b // n_chunks) * d_model * 4      # live f32 intermediates
    vmem_limit = int(min(max(1.25 * (wbuf + xbuf + obuf + act) + (8 << 20),
                             32 << 20), 64 << 20))

    def bcast(shape):
        # Full-array block with constant index_map: stays VMEM-resident across
        # the whole grid (Pallas does not re-fetch an unchanged block).
        kwargs = {}
        if single_buffer:
            kwargs["pipeline_mode"] = pl.Buffered(1)
        return pl.BlockSpec(shape, lambda i: (0,) * len(shape), **kwargs)

    in_specs = [
        pl.BlockSpec((block_b, d_model), lambda i: (i, 0)),        # x tile (f32)
        bcast((d_model, d_model)), bcast((1, d_model)),            # w1, b1
        bcast((1, d_model)), bcast((1, d_model)),                  # ln1 gamma/beta
        bcast((d_model, d_model)), bcast((1, d_model)),            # w2, b2
        bcast((1, d_model)), bcast((1, d_model)),                  # ln2 gamma/beta
        bcast((d_model, n_out_pad)), bcast((1, n_out_pad)),        # w_out, b_out
    ]
    out_spec = pl.BlockSpec((block_b, n_out_pad), lambda i: (i, 0))

    out = pl.pallas_call(
        functools.partial(disc_kernel, n_chunks=n_chunks),
        out_shape=jax.ShapeDtypeStruct((batch_pad, n_out_pad), jnp.bfloat16),
        grid_spec=pl.GridSpec(grid=grid, in_specs=in_specs, out_specs=out_spec),
        compiler_params=pltpu.CompilerParams(
            dimension_semantics=("parallel",),
            vmem_limit_bytes=vmem_limit),
    )(x_p,
      prepared["w1"], prepared["b1"], prepared["g1"], prepared["be1"],
      prepared["w2"], prepared["b2"], prepared["g2"], prepared["be2"],
      prepared["wo"], prepared["bo"])

    return out[:batch, :n_cls].astype(jnp.float32)


def init_params(key, d_model, n_cls):
    """Deterministic synthetic parameters matching the module's shapes.

    Linear weights are stored already transposed to [in, out] so the kernel
    computes x @ W + b (PyTorch stores [out, in] and does x @ W.T + b)."""
    ks = jax.random.split(key, 6)
    scale = 1.0 / jnp.sqrt(d_model)
    return {
        "w1": jax.random.uniform(ks[0], (d_model, d_model), jnp.float32, -scale, scale),
        "b1": jax.random.uniform(ks[1], (1, d_model), jnp.float32, -scale, scale),
        "g1": jnp.ones((1, d_model), jnp.float32),
        "be1": jnp.zeros((1, d_model), jnp.float32),
        "w2": jax.random.uniform(ks[2], (d_model, d_model), jnp.float32, -scale, scale),
        "b2": jax.random.uniform(ks[3], (1, d_model), jnp.float32, -scale, scale),
        "g2": jnp.ones((1, d_model), jnp.float32),
        "be2": jnp.zeros((1, d_model), jnp.float32),
        "wo": jax.random.uniform(ks[4], (d_model, n_cls), jnp.float32, -scale, scale),
        "bo": jax.random.uniform(ks[5], (1, n_cls), jnp.float32, -scale, scale),
    }


def reference_forward(x, p):
    """Pure-JAX f32 reference mirroring the PyTorch module exactly."""
    def block(h, w, b, g, be):
        h = h @ w + b
        h = jnp.where(h > 0, h, LEAKY_SLOPE * h)
        mu = h.mean(-1, keepdims=True)
        var = ((h - mu) ** 2).mean(-1, keepdims=True)
        return (h - mu) / jnp.sqrt(var + LN_EPS) * g + be
    h = block(x, p["w1"], p["b1"], p["g1"], p["be1"])
    h = block(h, p["w2"], p["b2"], p["g2"], p["be2"])
    return h @ p["wo"] + p["bo"]


if __name__ == "__main__":
    d_model, n_cls, batch = 128, 8, 20   # batch not a multiple of 8: exercises tail padding

    key = jax.random.PRNGKey(0)
    kx, kp = jax.random.split(key)
    x = jax.random.normal(kx, (batch, d_model), jnp.float32)
    params = init_params(kp, d_model, n_cls)
    prepared, n_cls_p = prepare_params(params)     # one-time bf16 / padding prep

    ref = reference_forward(x, params)

    fwd = jax.jit(adversarial_discriminator, static_argnums=(2,),
                  static_argnames=("block_b",))

    # Default tiling: block_b=16 here -> grid of 2 steps (multi-step parallel
    # grid + padded tail + 2-row-chunk in-kernel loop).
    out = jax.block_until_ready(fwd(x, prepared, n_cls_p))
    assert out.shape == (batch, n_cls)
    # Tolerance covers the bf16 MXU path and bf16 output writeback.
    assert jnp.allclose(out, ref, atol=3e-2, rtol=3e-2), "mismatch vs reference (default tile)"

    # Small explicit tile: grid of 3 steps, single-chunk kernel path.
    out2 = jax.block_until_ready(fwd(x, prepared, n_cls_p, block_b=8))
    assert out2.shape == (batch, n_cls)
    assert jnp.allclose(out2, ref, atol=3e-2, rtol=3e-2), "mismatch vs reference (block_b=8)"

    print("KERNEL_OK")
</pallas_src>

<mosaic_0001>
module attributes {stable_mosaic.version = 11 : i64} {
  func.func @disc_kernel(%arg0: i32, %arg1: memref<16x128xf32, #tpu.memory_space<vmem>>, %arg2: memref<128x128xbf16, #tpu.memory_space<vmem>>, %arg3: memref<1x128xf32, #tpu.memory_space<vmem>>, %arg4: memref<1x128xf32, #tpu.memory_space<vmem>>, %arg5: memref<1x128xf32, #tpu.memory_space<vmem>>, %arg6: memref<128x128xbf16, #tpu.memory_space<vmem>>, %arg7: memref<1x128xf32, #tpu.memory_space<vmem>>, %arg8: memref<1x128xf32, #tpu.memory_space<vmem>>, %arg9: memref<1x128xf32, #tpu.memory_space<vmem>>, %arg10: memref<128x128xbf16, #tpu.memory_space<vmem>>, %arg11: memref<1x128xf32, #tpu.memory_space<vmem>>, %arg12: memref<16x128xbf16, #tpu.memory_space<vmem>>) attributes {dimension_semantics = [#tpu.dimension_semantics<parallel>], iteration_bounds = array<i64: 2>, scalar_prefetch = 0 : i64, scratch_operands = 0 : i64, tpu.core_type = #tpu.core_type<tc>, window_params = [{transform_indices = @transform_0, window_bounds = array<i64: 16, 128>}, {pipeline_mode = #tpu.pipeline_mode<synchronous>, transform_indices = @transform_1, window_bounds = array<i64: 128, 128>}, {pipeline_mode = #tpu.pipeline_mode<synchronous>, transform_indices = @transform_2, window_bounds = array<i64: 1, 128>}, {pipeline_mode = #tpu.pipeline_mode<synchronous>, transform_indices = @transform_3, window_bounds = array<i64: 1, 128>}, {pipeline_mode = #tpu.pipeline_mode<synchronous>, transform_indices = @transform_4, window_bounds = array<i64: 1, 128>}, {pipeline_mode = #tpu.pipeline_mode<synchronous>, transform_indices = @transform_5, window_bounds = array<i64: 128, 128>}, {pipeline_mode = #tpu.pipeline_mode<synchronous>, transform_indices = @transform_6, window_bounds = array<i64: 1, 128>}, {pipeline_mode = #tpu.pipeline_mode<synchronous>, transform_indices = @transform_7, window_bounds = array<i64: 1, 128>}, {pipeline_mode = #tpu.pipeline_mode<synchronous>, transform_indices = @transform_8, window_bounds = array<i64: 1, 128>}, {pipeline_mode = #tpu.pipeline_mode<synchronous>, transform_indices = @transform_9, window_bounds = array<i64: 128, 128>}, {pipeline_mode = #tpu.pipeline_mode<synchronous>, transform_indices = @transform_10, window_bounds = array<i64: 1, 128>}, {transform_indices = @transform_11, window_bounds = array<i64: 16, 128>}]} {
    %c0 = arith.constant 0 : index
    %c0_0 = arith.constant 0 : index
    %0 = vector.load %arg1[%c0, %c0_0] : memref<16x128xf32, #tpu.memory_space<vmem>>, vector<8x128xf32>
    %1 = arith.truncf %0 : vector<8x128xf32> to vector<8x128xbf16>
    %c0_1 = arith.constant 0 : index
    %c0_2 = arith.constant 0 : index
    %2 = vector.load %arg2[%c0_1, %c0_2] : memref<128x128xbf16, #tpu.memory_space<vmem>>, vector<128x128xbf16>
    %cst = arith.constant dense<0.000000e+00> : vector<8x128xf32>
    %3 = tpu.matmul %1, %2, %cst {dimension_numbers = #tpu.dot_dimension_numbers<[1], [0], [0], [1], [0, 0, 1, 1], [], []>} : vector<8x128xbf16>, vector<128x128xbf16>, vector<8x128xf32> -> vector<8x128xf32>
    %c0_3 = arith.constant 0 : index
    %c0_4 = arith.constant 0 : index
    %4 = vector.load %arg3[%c0_3, %c0_4] : memref<1x128xf32, #tpu.memory_space<vmem>>, vector<1x128xf32>
    %5 = vector.broadcast %4 : vector<1x128xf32> to vector<8x128xf32>
    %6 = arith.addf %3, %5 : vector<8x128xf32>
    %cst_5 = arith.constant 0.000000e+00 : f32
    %7 = vector.broadcast %cst_5 : f32 to vector<8x128xf32>
    %8 = arith.cmpf ogt, %6, %7 : vector<8x128xf32>
    %cst_6 = arith.constant 0.00999999977 : f32
    %9 = vector.broadcast %cst_6 : f32 to vector<8x128xf32>
    %10 = arith.mulf %9, %6 : vector<8x128xf32>
    %11 = arith.select %8, %6, %10 : vector<8x128xi1>, vector<8x128xf32>
    %cst_7 = arith.constant dense<0.000000e+00> : vector<8xf32>
    %12 = vector.multi_reduction <add>, %11, %cst_7 [1] : vector<8x128xf32> to vector<8xf32>
    %13 = vector.shape_cast %12 : vector<8xf32> to vector<8x1xf32>
    %cst_8 = arith.constant 1.280000e+02 : f32
    %14 = vector.broadcast %cst_8 : f32 to vector<8x1xf32>
    %15 = arith.divf %13, %14 : vector<8x1xf32>
    %16 = arith.mulf %11, %11 : vector<8x128xf32>
    %cst_9 = arith.constant dense<0.000000e+00> : vector<8xf32>
    %17 = vector.multi_reduction <add>, %16, %cst_9 [1] : vector<8x128xf32> to vector<8xf32>
    %18 = vector.shape_cast %17 : vector<8xf32> to vector<8x1xf32>
    %cst_10 = arith.constant 1.280000e+02 : f32
    %19 = vector.broadcast %cst_10 : f32 to vector<8x1xf32>
    %20 = arith.divf %18, %19 : vector<8x1xf32>
    %21 = arith.mulf %15, %15 : vector<8x1xf32>
    %22 = arith.subf %20, %21 : vector<8x1xf32>
    %cst_11 = arith.constant 0.000000e+00 : f32
    %23 = vector.broadcast %cst_11 : f32 to vector<8x1xf32>
    %24 = arith.maximumf %22, %23 : vector<8x1xf32>
    %25 = vector.broadcast %15 : vector<8x1xf32> to vector<8x128xf32>
    %26 = arith.subf %11, %25 : vector<8x128xf32>
    %cst_12 = arith.constant 9.99999974E-6 : f32
    %27 = vector.broadcast %cst_12 : f32 to vector<8x1xf32>
    %28 = arith.addf %24, %27 : vector<8x1xf32>
    %29 = math.rsqrt %28 : vector<8x1xf32>
    %30 = vector.broadcast %29 : vector<8x1xf32> to vector<8x128xf32>
    %31 = arith.mulf %26, %30 : vector<8x128xf32>
    %c0_13 = arith.constant 0 : index
    %c0_14 = arith.constant 0 : index
    %32 = vector.load %arg4[%c0_13, %c0_14] : memref<1x128xf32, #tpu.memory_space<vmem>>, vector<1x128xf32>
    %33 = vector.broadcast %32 : vector<1x128xf32> to vector<8x128xf32>
    %34 = arith.mulf %31, %33 : vector<8x128xf32>
    %c0_15 = arith.constant 0 : index
    %c0_16 = arith.constant 0 : index
    %35 = vector.load %arg5[%c0_15, %c0_16] : memref<1x128xf32, #tpu.memory_space<vmem>>, vector<1x128xf32>
    %36 = vector.broadcast %35 : vector<1x128xf32> to vector<8x128xf32>
    %37 = arith.addf %34, %36 : vector<8x128xf32>
    %38 = arith.truncf %37 : vector<8x128xf32> to vector<8x128xbf16>
    %c0_17 = arith.constant 0 : index
    %c0_18 = arith.constant 0 : index
    %39 = vector.load %arg6[%c0_17, %c0_18] : memref<128x128xbf16, #tpu.memory_space<vmem>>, vector<128x128xbf16>
    %cst_19 = arith.constant dense<0.000000e+00> : vector<8x128xf32>
    %40 = tpu.matmul %38, %39, %cst_19 {dimension_numbers = #tpu.dot_dimension_numbers<[1], [0], [0], [1], [0, 0, 1, 1], [], []>} : vector<8x128xbf16>, vector<128x128xbf16>, vector<8x128xf32> -> vector<8x128xf32>
    %c0_20 = arith.constant 0 : index
    %c0_21 = arith.constant 0 : index
    %41 = vector.load %arg7[%c0_20, %c0_21] : memref<1x128xf32, #tpu.memory_space<vmem>>, vector<1x128xf32>
    %42 = vector.broadcast %41 : vector<1x128xf32> to vector<8x128xf32>
    %43 = arith.addf %40, %42 : vector<8x128xf32>
    %cst_22 = arith.constant 0.000000e+00 : f32
    %44 = vector.broadcast %cst_22 : f32 to vector<8x128xf32>
    %45 = arith.cmpf ogt, %43, %44 : vector<8x128xf32>
    %cst_23 = arith.constant 0.00999999977 : f32
    %46 = vector.broadcast %cst_23 : f32 to vector<8x128xf32>
    %47 = arith.mulf %46, %43 : vector<8x128xf32>
    %48 = arith.select %45, %43, %47 : vector<8x128xi1>, vector<8x128xf32>
    %cst_24 = arith.constant dense<0.000000e+00> : vector<8xf32>
    %49 = vector.multi_reduction <add>, %48, %cst_24 [1] : vector<8x128xf32> to vector<8xf32>
    %50 = vector.shape_cast %49 : vector<8xf32> to vector<8x1xf32>
    %cst_25 = arith.constant 1.280000e+02 : f32
    %51 = vector.broadcast %cst_25 : f32 to vector<8x1xf32>
    %52 = arith.divf %50, %51 : vector<8x1xf32>
    %53 = arith.mulf %48, %48 : vector<8x128xf32>
    %cst_26 = arith.constant dense<0.000000e+00> : vector<8xf32>
    %54 = vector.multi_reduction <add>, %53, %cst_26 [1] : vector<8x128xf32> to vector<8xf32>
    %55 = vector.shape_cast %54 : vector<8xf32> to vector<8x1xf32>
    %cst_27 = arith.constant 1.280000e+02 : f32
    %56 = vector.broadcast %cst_27 : f32 to vector<8x1xf32>
    %57 = arith.divf %55, %56 : vector<8x1xf32>
    %58 = arith.mulf %52, %52 : vector<8x1xf32>
    %59 = arith.subf %57, %58 : vector<8x1xf32>
    %cst_28 = arith.constant 0.000000e+00 : f32
    %60 = vector.broadcast %cst_28 : f32 to vector<8x1xf32>
    %61 = arith.maximumf %59, %60 : vector<8x1xf32>
    %62 = vector.broadcast %52 : vector<8x1xf32> to vector<8x128xf32>
    %63 = arith.subf %48, %62 : vector<8x128xf32>
    %cst_29 = arith.constant 9.99999974E-6 : f32
    %64 = vector.broadcast %cst_29 : f32 to vector<8x1xf32>
    %65 = arith.addf %61, %64 : vector<8x1xf32>
    %66 = math.rsqrt %65 : vector<8x1xf32>
    %67 = vector.broadcast %66 : vector<8x1xf32> to vector<8x128xf32>
    %68 = arith.mulf %63, %67 : vector<8x128xf32>
    %c0_30 = arith.constant 0 : index
    %c0_31 = arith.constant 0 : index
    %69 = vector.load %arg8[%c0_30, %c0_31] : memref<1x128xf32, #tpu.memory_space<vmem>>, vector<1x128xf32>
    %70 = vector.broadcast %69 : vector<1x128xf32> to vector<8x128xf32>
    %71 = arith.mulf %68, %70 : vector<8x128xf32>
    %c0_32 = arith.constant 0 : index
    %c0_33 = arith.constant 0 : index
    %72 = vector.load %arg9[%c0_32, %c0_33] : memref<1x128xf32, #tpu.memory_space<vmem>>, vector<1x128xf32>
    %73 = vector.broadcast %72 : vector<1x128xf32> to vector<8x128xf32>
    %74 = arith.addf %71, %73 : vector<8x128xf32>
    %75 = arith.truncf %74 : vector<8x128xf32> to vector<8x128xbf16>
    %c0_34 = arith.constant 0 : index
    %c0_35 = arith.constant 0 : index
    %76 = vector.load %arg10[%c0_34, %c0_35] : memref<128x128xbf16, #tpu.memory_space<vmem>>, vector<128x128xbf16>
    %cst_36 = arith.constant dense<0.000000e+00> : vector<8x128xf32>
    %77 = tpu.matmul %75, %76, %cst_36 {dimension_numbers = #tpu.dot_dimension_numbers<[1], [0], [0], [1], [0, 0, 1, 1], [], []>} : vector<8x128xbf16>, vector<128x128xbf16>, vector<8x128xf32> -> vector<8x128xf32>
    %c0_37 = arith.constant 0 : index
    %c0_38 = arith.constant 0 : index
    %78 = vector.load %arg11[%c0_37, %c0_38] : memref<1x128xf32, #tpu.memory_space<vmem>>, vector<1x128xf32>
    %79 = vector.broadcast %78 : vector<1x128xf32> to vector<8x128xf32>
    %80 = arith.addf %77, %79 : vector<8x128xf32>
    %81 = arith.truncf %80 : vector<8x128xf32> to vector<8x128xbf16>
    %c0_39 = arith.constant 0 : index
    %c0_40 = arith.constant 0 : index
    %82 = vector.load %arg12[%c0_39, %c0_40] : memref<16x128xbf16, #tpu.memory_space<vmem>>, vector<8x128xbf16>
    tpu.vector_store %arg12[%c0_39, %c0_40], %81 {strides = array<i32>} : memref<16x128xbf16, #tpu.memory_space<vmem>>, vector<8x128xbf16>,
    %c8 = arith.constant 8 : index
    %c0_41 = arith.constant 0 : index
    %83 = vector.load %arg1[%c8, %c0_41] : memref<16x128xf32, #tpu.memory_space<vmem>>, vector<8x128xf32>
    %84 = arith.truncf %83 : vector<8x128xf32> to vector<8x128xbf16>
    %c0_42 = arith.constant 0 : index
    %c0_43 = arith.constant 0 : index
    %85 = vector.load %arg2[%c0_42, %c0_43] : memref<128x128xbf16, #tpu.memory_space<vmem>>, vector<128x128xbf16>
    %cst_44 = arith.constant dense<0.000000e+00> : vector<8x128xf32>
    %86 = tpu.matmul %84, %85, %cst_44 {dimension_numbers = #tpu.dot_dimension_numbers<[1], [0], [0], [1], [0, 0, 1, 1], [], []>} : vector<8x128xbf16>, vector<128x128xbf16>, vector<8x128xf32> -> vector<8x128xf32>
    %c0_45 = arith.constant 0 : index
    %c0_46 = arith.constant 0 : index
    %87 = vector.load %arg3[%c0_45, %c0_46] : memref<1x128xf32, #tpu.memory_space<vmem>>, vector<1x128xf32>
    %88 = vector.broadcast %87 : vector<1x128xf32> to vector<8x128xf32>
    %89 = arith.addf %86, %88 : vector<8x128xf32>
    %cst_47 = arith.constant 0.000000e+00 : f32
    %90 = vector.broadcast %cst_47 : f32 to vector<8x128xf32>
    %91 = arith.cmpf ogt, %89, %90 : vector<8x128xf32>
    %cst_48 = arith.constant 0.00999999977 : f32
    %92 = vector.broadcast %cst_48 : f32 to vector<8x128xf32>
    %93 = arith.mulf %92, %89 : vector<8x128xf32>
    %94 = arith.select %91, %89, %93 : vector<8x128xi1>, vector<8x128xf32>
    %cst_49 = arith.constant dense<0.000000e+00> : vector<8xf32>
    %95 = vector.multi_reduction <add>, %94, %cst_49 [1] : vector<8x128xf32> to vector<8xf32>
    %96 = vector.shape_cast %95 : vector<8xf32> to vector<8x1xf32>
    %cst_50 = arith.constant 1.280000e+02 : f32
    %97 = vector.broadcast %cst_50 : f32 to vector<8x1xf32>
    %98 = arith.divf %96, %97 : vector<8x1xf32>
    %99 = arith.mulf %94, %94 : vector<8x128xf32>
    %cst_51 = arith.constant dense<0.000000e+00> : vector<8xf32>
    %100 = vector.multi_reduction <add>, %99, %cst_51 [1] : vector<8x128xf32> to vector<8xf32>
    %101 = vector.shape_cast %100 : vector<8xf32> to vector<8x1xf32>
    %cst_52 = arith.constant 1.280000e+02 : f32
    %102 = vector.broadcast %cst_52 : f32 to vector<8x1xf32>
    %103 = arith.divf %101, %102 : vector<8x1xf32>
    %104 = arith.mulf %98, %98 : vector<8x1xf32>
    %105 = arith.subf %103, %104 : vector<8x1xf32>
    %cst_53 = arith.constant 0.000000e+00 : f32
    %106 = vector.broadcast %cst_53 : f32 to vector<8x1xf32>
    %107 = arith.maximumf %105, %106 : vector<8x1xf32>
    %108 = vector.broadcast %98 : vector<8x1xf32> to vector<8x128xf32>
    %109 = arith.subf %94, %108 : vector<8x128xf32>
    %cst_54 = arith.constant 9.99999974E-6 : f32
    %110 = vector.broadcast %cst_54 : f32 to vector<8x1xf32>
    %111 = arith.addf %107, %110 : vector<8x1xf32>
    %112 = math.rsqrt %111 : vector<8x1xf32>
    %113 = vector.broadcast %112 : vector<8x1xf32> to vector<8x128xf32>
    %114 = arith.mulf %109, %113 : vector<8x128xf32>
    %c0_55 = arith.constant 0 : index
    %c0_56 = arith.constant 0 : index
    %115 = vector.load %arg4[%c0_55, %c0_56] : memref<1x128xf32, #tpu.memory_space<vmem>>, vector<1x128xf32>
    %116 = vector.broadcast %115 : vector<1x128xf32> to vector<8x128xf32>
    %117 = arith.mulf %114, %116 : vector<8x128xf32>
    %c0_57 = arith.constant 0 : index
    %c0_58 = arith.constant 0 : index
    %118 = vector.load %arg5[%c0_57, %c0_58] : memref<1x128xf32, #tpu.memory_space<vmem>>, vector<1x128xf32>
    %119 = vector.broadcast %118 : vector<1x128xf32> to vector<8x128xf32>
    %120 = arith.addf %117, %119 : vector<8x128xf32>
    %121 = arith.truncf %120 : vector<8x128xf32> to vector<8x128xbf16>
    %c0_59 = arith.constant 0 : index
    %c0_60 = arith.constant 0 : index
    %122 = vector.load %arg6[%c0_59, %c0_60] : memref<128x128xbf16, #tpu.memory_space<vmem>>, vector<128x128xbf16>
    %cst_61 = arith.constant dense<0.000000e+00> : vector<8x128xf32>
    %123 = tpu.matmul %121, %122, %cst_61 {dimension_numbers = #tpu.dot_dimension_numbers<[1], [0], [0], [1], [0, 0, 1, 1], [], []>} : vector<8x128xbf16>, vector<128x128xbf16>, vector<8x128xf32> -> vector<8x128xf32>
    %c0_62 = arith.constant 0 : index
    %c0_63 = arith.constant 0 : index
    %124 = vector.load %arg7[%c0_62, %c0_63] : memref<1x128xf32, #tpu.memory_space<vmem>>, vector<1x128xf32>
    %125 = vector.broadcast %124 : vector<1x128xf32> to vector<8x128xf32>
    %126 = arith.addf %123, %125 : vector<8x128xf32>
    %cst_64 = arith.constant 0.000000e+00 : f32
    %127 = vector.broadcast %cst_64 : f32 to vector<8x128xf32>
    %128 = arith.cmpf ogt, %126, %127 : vector<8x128xf32>
    %cst_65 = arith.constant 0.00999999977 : f32
    %129 = vector.broadcast %cst_65 : f32 to vector<8x128xf32>
    %130 = arith.mulf %129, %126 : vector<8x128xf32>
    %131 = arith.select %128, %126, %130 : vector<8x128xi1>, vector<8x128xf32>
    %cst_66 = arith.constant dense<0.000000e+00> : vector<8xf32>
    %132 = vector.multi_reduction <add>, %131, %cst_66 [1] : vector<8x128xf32> to vector<8xf32>
    %133 = vector.shape_cast %132 : vector<8xf32> to vector<8x1xf32>
    %cst_67 = arith.constant 1.280000e+02 : f32
    %134 = vector.broadcast %cst_67 : f32 to vector<8x1xf32>
    %135 = arith.divf %133, %134 : vector<8x1xf32>
    %136 = arith.mulf %131, %131 : vector<8x128xf32>
    %cst_68 = arith.constant dense<0.000000e+00> : vector<8xf32>
    %137 = vector.multi_reduction <add>, %136, %cst_68 [1] : vector<8x128xf32> to vector<8xf32>
    %138 = vector.shape_cast %137 : vector<8xf32> to vector<8x1xf32>
    %cst_69 = arith.constant 1.280000e+02 : f32
    %139 = vector.broadcast %cst_69 : f32 to vector<8x1xf32>
    %140 = arith.divf %138, %139 : vector<8x1xf32>
    %141 = arith.mulf %135, %135 : vector<8x1xf32>
    %142 = arith.subf %140, %141 : vector<8x1xf32>
    %cst_70 = arith.constant 0.000000e+00 : f32
    %143 = vector.broadcast %cst_70 : f32 to vector<8x1xf32>
    %144 = arith.maximumf %142, %143 : vector<8x1xf32>
    %145 = vector.broadcast %135 : vector<8x1xf32> to vector<8x128xf32>
    %146 = arith.subf %131, %145 : vector<8x128xf32>
    %cst_71 = arith.constant 9.99999974E-6 : f32
    %147 = vector.broadcast %cst_71 : f32 to vector<8x1xf32>
    %148 = arith.addf %144, %147 : vector<8x1xf32>
    %149 = math.rsqrt %148 : vector<8x1xf32>
    %150 = vector.broadcast %149 : vector<8x1xf32> to vector<8x128xf32>
    %151 = arith.mulf %146, %150 : vector<8x128xf32>
    %c0_72 = arith.constant 0 : index
    %c0_73 = arith.constant 0 : index
    %152 = vector.load %arg8[%c0_72, %c0_73] : memref<1x128xf32, #tpu.memory_space<vmem>>, vector<1x128xf32>
    %153 = vector.broadcast %152 : vector<1x128xf32> to vector<8x128xf32>
    %154 = arith.mulf %151, %153 : vector<8x128xf32>
    %c0_74 = arith.constant 0 : index
    %c0_75 = arith.constant 0 : index
    %155 = vector.load %arg9[%c0_74, %c0_75] : memref<1x128xf32, #tpu.memory_space<vmem>>, vector<1x128xf32>
    %156 = vector.broadcast %155 : vector<1x128xf32> to vector<8x128xf32>
    %157 = arith.addf %154, %156 : vector<8x128xf32>
    %158 = arith.truncf %157 : vector<8x128xf32> to vector<8x128xbf16>
    %c0_76 = arith.constant 0 : index
    %c0_77 = arith.constant 0 : index
    %159 = vector.load %arg10[%c0_76, %c0_77] : memref<128x128xbf16, #tpu.memory_space<vmem>>, vector<128x128xbf16>
    %cst_78 = arith.constant dense<0.000000e+00> : vector<8x128xf32>
    %160 = tpu.matmul %158, %159, %cst_78 {dimension_numbers = #tpu.dot_dimension_numbers<[1], [0], [0], [1], [0, 0, 1, 1], [], []>} : vector<8x128xbf16>, vector<128x128xbf16>, vector<8x128xf32> -> vector<8x128xf32>
    %c0_79 = arith.constant 0 : index
    %c0_80 = arith.constant 0 : index
    %161 = vector.load %arg11[%c0_79, %c0_80] : memref<1x128xf32, #tpu.memory_space<vmem>>, vector<1x128xf32>
    %162 = vector.broadcast %161 : vector<1x128xf32> to vector<8x128xf32>
    %163 = arith.addf %160, %162 : vector<8x128xf32>
    %164 = arith.truncf %163 : vector<8x128xf32> to vector<8x128xbf16>
    %c8_81 = arith.constant 8 : index
    %c0_82 = arith.constant 0 : index
    %165 = vector.load %arg12[%c8_81, %c0_82] : memref<16x128xbf16, #tpu.memory_space<vmem>>, vector<8x128xbf16>
    tpu.vector_store %arg12[%c8_81, %c0_82], %164 {strides = array<i32>} : memref<16x128xbf16, #tpu.memory_space<vmem>>, vector<8x128xbf16>,
    return
  }
  func.func @transform_0(%arg0: i32) -> (i32, i32) {
    %c0_i32 = arith.constant 0 : i32
    %c0_i32_0 = arith.constant 0 : i32
    return %arg0, %c0_i32 : i32, i32
  }
  func.func @transform_1(%arg0: i32) -> (i32, i32) {
    %c0_i32 = arith.constant 0 : i32
    %c0_i32_0 = arith.constant 0 : i32
    %c0_i32_1 = arith.constant 0 : i32
    return %c0_i32, %c0_i32_0 : i32, i32
  }
  func.func @transform_2(%arg0: i32) -> (i32, i32) {
    %c0_i32 = arith.constant 0 : i32
    %c0_i32_0 = arith.constant 0 : i32
    %c0_i32_1 = arith.constant 0 : i32
    return %c0_i32, %c0_i32_0 : i32, i32
  }
  func.func @transform_3(%arg0: i32) -> (i32, i32) {
    %c0_i32 = arith.constant 0 : i32
    %c0_i32_0 = arith.constant 0 : i32
    %c0_i32_1 = arith.constant 0 : i32
    return %c0_i32, %c0_i32_0 : i32, i32
  }
  func.func @transform_4(%arg0: i32) -> (i32, i32) {
    %c0_i32 = arith.constant 0 : i32
    %c0_i32_0 = arith.constant 0 : i32
    %c0_i32_1 = arith.constant 0 : i32
    return %c0_i32, %c0_i32_0 : i32, i32
  }
  func.func @transform_5(%arg0: i32) -> (i32, i32) {
    %c0_i32 = arith.constant 0 : i32
    %c0_i32_0 = arith.constant 0 : i32
    %c0_i32_1 = arith.constant 0 : i32
    return %c0_i32, %c0_i32_0 : i32, i32
  }
  func.func @transform_6(%arg0: i32) -> (i32, i32) {
    %c0_i32 = arith.constant 0 : i32
    %c0_i32_0 = arith.constant 0 : i32
    %c0_i32_1 = arith.constant 0 : i32
    return %c0_i32, %c0_i32_0 : i32, i32
  }
  func.func @transform_7(%arg0: i32) -> (i32, i32) {
    %c0_i32 = arith.constant 0 : i32
    %c0_i32_0 = arith.constant 0 : i32
    %c0_i32_1 = arith.constant 0 : i32
    return %c0_i32, %c0_i32_0 : i32, i32
  }
  func.func @transform_8(%arg0: i32) -> (i32, i32) {
    %c0_i32 = arith.constant 0 : i32
    %c0_i32_0 = arith.constant 0 : i32
    %c0_i32_1 = arith.constant 0 : i32
    return %c0_i32, %c0_i32_0 : i32, i32
  }
  func.func @transform_9(%arg0: i32) -> (i32, i32) {
    %c0_i32 = arith.constant 0 : i32
    %c0_i32_0 = arith.constant 0 : i32
    %c0_i32_1 = arith.constant 0 : i32
    return %c0_i32, %c0_i32_0 : i32, i32
  }
  func.func @transform_10(%arg0: i32) -> (i32, i32) {
    %c0_i32 = arith.constant 0 : i32
    %c0_i32_0 = arith.constant 0 : i32
    %c0_i32_1 = arith.constant 0 : i32
    return %c0_i32, %c0_i32_0 : i32, i32
  }
  func.func @transform_11(%arg0: i32) -> (i32, i32) {
    %c0_i32 = arith.constant 0 : i32
    %c0_i32_0 = arith.constant 0 : i32
    return %arg0, %c0_i32 : i32, i32
  }
}

</mosaic_0001>

<llo_original>
// kernel: adversarial_discriminator.1
$region0: #{adversarial_discriminator.1}
  #allocation0 [shape = 'u32[]', space=smem, size = 0x4, offset = 0x4, fixed_abs, tag = 'smem constant byte address 0x4 - core index']
  #allocation1 [shape = 'u32[144,128]{1,0:T(1,128)}', space=vmem, size = 0x12000, scoped, tag = 'internal scratch']
  %s0 = inlined_call_operand.vmem [shape: f32[32,128], index: 0, kind: input, shape index: {}]
  %s1 = inlined_call_operand.vmem [shape: bf16[128,128], index: 1, kind: input, shape index: {}]
  %s2 = inlined_call_operand.vmem [shape: f32[1,128], index: 2, kind: input, shape index: {}]
  %s3 = inlined_call_operand.vmem [shape: f32[1,128], index: 3, kind: input, shape index: {}]
  %s4 = inlined_call_operand.vmem [shape: f32[1,128], index: 4, kind: input, shape index: {}]
  %s5 = inlined_call_operand.hbm [shape: bf16[128,128], index: 5, kind: input, shape index: {}]
  %s6 = inlined_call_operand.vmem [shape: f32[1,128], index: 6, kind: input, shape index: {}]
  %s7 = inlined_call_operand.vmem [shape: f32[1,128], index: 7, kind: input, shape index: {}]
  %s8 = inlined_call_operand.vmem [shape: f32[1,128], index: 8, kind: input, shape index: {}]
  %s9 = inlined_call_operand.hbm [shape: bf16[128,128], index: 9, kind: input, shape index: {}]
  %s10 = inlined_call_operand.vmem [shape: f32[1,128], index: 10, kind: input, shape index: {}]
  %s11 = inlined_call_operand.vmem [shape: bf16[32,128], index: 11, kind: output, shape index: {}]
  %s12 = sld [smem:[#allocation0]]
  $region85: #{adversarial_discriminator.1} parent=0
    _
  %s14 = ssub.s32 1, %s12
  %s15 = scalar_select 0, %s14, %s12
  $region1: #{adversarial_discriminator.1} parent=0
    #allocation2 [shape = 'u8[32768]{0}', space=vmem, size = 0x8000, scoped, tag = 'input window, operand 5, single buffered']
    #allocation3 [shape = 's32[2]{0}', space=sflag, size = 0x8, scoped, tag = 'scoped memory for adversarial_discriminator.1']
    #allocation4 [shape = 'u8[32768]{0}', space=vmem, size = 0x8000, scoped, tag = 'input window, operand 9, single buffered']
    #allocation5 [shape = 's32[1]{0}', space=sflag, size = 0x4, scoped, tag = 'scoped memory for adversarial_discriminator.1']
    %16 = vsyncpa [#allocation3], 0
    %17 = vsyncpa [#allocation5], 0
    loop: start=0, step=1, limit=4
    $region2: #{adversarial_discriminator.1} parent=1 // loop_pre_header
      _
    $region3: #{adversarial_discriminator.1} parent=1 // loop_header
      %s19 = sphi 0, %s23
      %p20 = scmp.ge.s32.totalorder %s19, 4
      %s29 = sphi 0, %s31
      %s32 = sphi 0, %s29
      %s33 = sphi 0, %s32
      %s49 = sphi 0, %s33
      %s53 = sphi 0, %s53
      %s55 = sphi 0, %s53
      %s56 = sphi 0, %s55
      %s70 = sphi 0, %s56
      %s74 = sphi 0, %s74
      %s76 = sphi 0, %s74
      %s77 = sphi 0, %s76
      %s91 = sphi 0, %s77
      %s95 = sphi 0, %s95
      %s97 = sphi 0, %s95
      %s98 = sphi 0, %s97
      %s112 = sphi 0, %s98
      %s116 = sphi 0, %s116
      %s118 = sphi 0, %s116
      %s119 = sphi 0, %s118
      %s133 = sphi 0, %s119
      %s137 = sphi 0, %s137
      %s139 = sphi 0, %s137
      %s140 = sphi 0, %s139
      %s154 = sphi 0, %s140
      %s158 = sphi 0, %s158
      %s160 = sphi 0, %s158
      %s161 = sphi 0, %s160
      %s175 = sphi 0, %s161
      %s179 = sphi 0, %s179
      %s181 = sphi 0, %s179
      %s182 = sphi 0, %s181
      %s196 = sphi 0, %s182
      %s200 = sphi 0, %s200
      %s202 = sphi 0, %s200
      %s203 = sphi 0, %s202
      %s217 = sphi 0, %s203
      %s221 = sphi 0, %s221
      %s223 = sphi 0, %s221
      %s224 = sphi 0, %s223
      %s238 = sphi 0, %s224
      %s242 = sphi 0, %s242
      %s244 = sphi 0, %s242
      %s245 = sphi 0, %s244
      %s259 = sphi 0, %s245
      %s265 = sphi 0, %s267
      %s268 = sphi 0, %s265
      %s269 = sphi 0, %s268
      %s285 = sphi 0, %s269
    $region4: #{adversarial_discriminator.1} parent=1 // loop_header_branch
      %22 = sbr.rel (%p20) target = $region8
    $region5: #{adversarial_discriminator.1} parent=1 // loop_body
      %s24 = ssub.s32 %s19, 1
      %s25 = ssub.s32 %s19, 2
      %s26 = sadd.s32 %s19, 1
      %s27 = ssub.s32 %s19, %s26
      %p28 = scmp.eq.s32.totalorder %s27, 0
      %s30 = sadd.s32 %s29, 1
      %s31 = scalar_select %p28, %s29, %s30
      %p34 = pneg %p28
      %p35 = scmp.eq.s32.totalorder %s19, 1
      %p36 = por %p34, %p35
      %p37 = scmp.ne.s32.totalorder %s29, %s32
      %p38 = scmp.eq.s32.totalorder %s19, 0
      %p39 = por %p37, %p38
      %p40 = scmp.ne.s32.totalorder %s29, %s32
      %p41 = scmp.eq.s32.totalorder %s24, 1
      %p42 = por %p40, %p41
      %p43 = scmp.ne.s32.totalorder %s32, %s33
      %p44 = scmp.eq.s32.totalorder %s24, 0
      %p45 = por %p43, %p44
      %p46 = scmp.ne.s32.totalorder %s32, %s33
      %p47 = scmp.eq.s32.totalorder %s25, 1
      %p48 = por %p46, %p47
      %p50 = scmp.ne.s32.totalorder %s33, %s49
      %p51 = scmp.eq.s32.totalorder %s25, 0
      %p52 = por %p50, %p51
      %s54 = sadd.s32 %s53, 1
      %p57 = scmp.eq.s32.totalorder %s19, 1
      %p58 = scmp.ne.s32.totalorder %s53, %s55
      %p59 = scmp.eq.s32.totalorder %s19, 0
      %p60 = por %p58, %p59
      %p61 = scmp.ne.s32.totalorder %s53, %s55
      %p62 = scmp.eq.s32.totalorder %s24, 1
      %p63 = por %p61, %p62
      %p64 = scmp.ne.s32.totalorder %s55, %s56
      %p65 = scmp.eq.s32.totalorder %s24, 0
      %p66 = por %p64, %p65
      %p67 = scmp.ne.s32.totalorder %s55, %s56
      %p68 = scmp.eq.s32.totalorder %s25, 1
      %p69 = por %p67, %p68
      %p71 = scmp.ne.s32.totalorder %s56, %s70
      %p72 = scmp.eq.s32.totalorder %s25, 0
      %p73 = por %p71, %p72
      %s75 = sadd.s32 %s74, 1
      %p78 = scmp.eq.s32.totalorder %s19, 1
      %p79 = scmp.ne.s32.totalorder %s74, %s76
      %p80 = scmp.eq.s32.totalorder %s19, 0
      %p81 = por %p79, %p80
      %p82 = scmp.ne.s32.totalorder %s74, %s76
      %p83 = scmp.eq.s32.totalorder %s24, 1
      %p84 = por %p82, %p83
      %p85 = scmp.ne.s32.totalorder %s76, %s77
      %p86 = scmp.eq.s32.totalorder %s24, 0
      %p87 = por %p85, %p86
      %p88 = scmp.ne.s32.totalorder %s76, %s77
      %p89 = scmp.eq.s32.totalorder %s25, 1
      %p90 = por %p88, %p89
      %p92 = scmp.ne.s32.totalorder %s77, %s91
      %p93 = scmp.eq.s32.totalorder %s25, 0
      %p94 = por %p92, %p93
      %s96 = sadd.s32 %s95, 1
      %p99 = scmp.eq.s32.totalorder %s19, 1
      %p100 = scmp.ne.s32.totalorder %s95, %s97
      %p101 = scmp.eq.s32.totalorder %s19, 0
      %p102 = por %p100, %p101
      %p103 = scmp.ne.s32.totalorder %s95, %s97
      %p104 = scmp.eq.s32.totalorder %s24, 1
      %p105 = por %p103, %p104
      %p106 = scmp.ne.s32.totalorder %s97, %s98
      %p107 = scmp.eq.s32.totalorder %s24, 0
      %p108 = por %p106, %p107
      %p109 = scmp.ne.s32.totalorder %s97, %s98
      %p110 = scmp.eq.s32.totalorder %s25, 1
      %p111 = por %p109, %p110
      %p113 = scmp.ne.s32.totalorder %s98, %s112
      %p114 = scmp.eq.s32.totalorder %s25, 0
      %p115 = por %p113, %p114
      %s117 = sadd.s32 %s116, 1
      %p120 = scmp.eq.s32.totalorder %s19, 1
      %p121 = scmp.ne.s32.totalorder %s116, %s118
      %p122 = scmp.eq.s32.totalorder %s19, 0
      %p123 = por %p121, %p122
      %p124 = scmp.ne.s32.totalorder %s116, %s118
      %p125 = scmp.eq.s32.totalorder %s24, 1
      %p126 = por %p124, %p125
      %p127 = scmp.ne.s32.totalorder %s118, %s119
      %p128 = scmp.eq.s32.totalorder %s24, 0
      %p129 = por %p127, %p128
      %p130 = scmp.ne.s32.totalorder %s118, %s119
      %p131 = scmp.eq.s32.totalorder %s25, 1
      %p132 = por %p130, %p131
      %p134 = scmp.ne.s32.totalorder %s119, %s133
      %p135 = scmp.eq.s32.totalorder %s25, 0
      %p136 = por %p134, %p135
      %s138 = sadd.s32 %s137, 1
      %p141 = scmp.eq.s32.totalorder %s19, 1
      %p142 = scmp.ne.s32.totalorder %s137, %s139
      %p143 = scmp.eq.s32.totalorder %s19, 0
      %p144 = por %p142, %p143
      %p145 = scmp.ne.s32.totalorder %s137, %s139
      %p146 = scmp.eq.s32.totalorder %s24, 1
      %p147 = por %p145, %p146
      %p148 = scmp.ne.s32.totalorder %s139, %s140
      %p149 = scmp.eq.s32.totalorder %s24, 0
      %p150 = por %p148, %p149
      %p151 = scmp.ne.s32.totalorder %s139, %s140
      %p152 = scmp.eq.s32.totalorder %s25, 1
      %p153 = por %p151, %p152
      %p155 = scmp.ne.s32.totalorder %s140, %s154
      %p156 = scmp.eq.s32.totalorder %s25, 0
      %p157 = por %p155, %p156
      %s159 = sadd.s32 %s158, 1
      %p162 = scmp.eq.s32.totalorder %s19, 1
      %p163 = scmp.ne.s32.totalorder %s158, %s160
      %p164 = scmp.eq.s32.totalorder %s19, 0
      %p165 = por %p163, %p164
      %p166 = scmp.ne.s32.totalorder %s158, %s160
      %p167 = scmp.eq.s32.totalorder %s24, 1
      %p168 = por %p166, %p167
      %p169 = scmp.ne.s32.totalorder %s160, %s161
      %p170 = scmp.eq.s32.totalorder %s24, 0
      %p171 = por %p169, %p170
      %p172 = scmp.ne.s32.totalorder %s160, %s161
      %p173 = scmp.eq.s32.totalorder %s25, 1
      %p174 = por %p172, %p173
      %p176 = scmp.ne.s32.totalorder %s161, %s175
      %p177 = scmp.eq.s32.totalorder %s25, 0
      %p178 = por %p176, %p177
      %s180 = sadd.s32 %s179, 1
      %p183 = scmp.eq.s32.totalorder %s19, 1
      %p184 = scmp.ne.s32.totalorder %s179, %s181
      %p185 = scmp.eq.s32.totalorder %s19, 0
      %p186 = por %p184, %p185
      %p187 = scmp.ne.s32.totalorder %s179, %s181
      %p188 = scmp.eq.s32.totalorder %s24, 1
      %p189 = por %p187, %p188
      %p190 = scmp.ne.s32.totalorder %s181, %s182
      %p191 = scmp.eq.s32.totalorder %s24, 0
      %p192 = por %p190, %p191
      %p193 = scmp.ne.s32.totalorder %s181, %s182
      %p194 = scmp.eq.s32.totalorder %s25, 1
      %p195 = por %p193, %p194
      %p197 = scmp.ne.s32.totalorder %s182, %s196
      %p198 = scmp.eq.s32.totalorder %s25, 0
      %p199 = por %p197, %p198
      %s201 = sadd.s32 %s200, 1
      %p204 = scmp.eq.s32.totalorder %s19, 1
      %p205 = scmp.ne.s32.totalorder %s200, %s202
      %p206 = scmp.eq.s32.totalorder %s19, 0
      %p207 = por %p205, %p206
      %p208 = scmp.ne.s32.totalorder %s200, %s202
      %p209 = scmp.eq.s32.totalorder %s24, 1
      %p210 = por %p208, %p209
      %p211 = scmp.ne.s32.totalorder %s202, %s203
      %p212 = scmp.eq.s32.totalorder %s24, 0
      %p213 = por %p211, %p212
      %p214 = scmp.ne.s32.totalorder %s202, %s203
      %p215 = scmp.eq.s32.totalorder %s25, 1
      %p216 = por %p214, %p215
      %p218 = scmp.ne.s32.totalorder %s203, %s217
      %p219 = scmp.eq.s32.totalorder %s25, 0
      %p220 = por %p218, %p219
      %s222 = sadd.s32 %s221, 1
      %p225 = scmp.eq.s32.totalorder %s19, 1
      %p226 = scmp.ne.s32.totalorder %s221, %s223
      %p227 = scmp.eq.s32.totalorder %s19, 0
      %p228 = por %p226, %p227
      %p229 = scmp.ne.s32.totalorder %s221, %s223
      %p230 = scmp.eq.s32.totalorder %s24, 1
      %p231 = por %p229, %p230
      %p232 = scmp.ne.s32.totalorder %s223, %s224
      %p233 = scmp.eq.s32.totalorder %s24, 0
      %p234 = por %p232, %p233
      %p235 = scmp.ne.s32.totalorder %s223, %s224
      %p236 = scmp.eq.s32.totalorder %s25, 1
      %p237 = por %p235, %p236
      %p239 = scmp.ne.s32.totalorder %s224, %s238
      %p240 = scmp.eq.s32.totalorder %s25, 0
      %p241 = por %p239, %p240
      %s243 = sadd.s32 %s242, 1
      %p246 = scmp.eq.s32.totalorder %s19, 1
      %p247 = scmp.ne.s32.totalorder %s242, %s244
      %p248 = scmp.eq.s32.totalorder %s19, 0
      %p249 = por %p247, %p248
      %p250 = scmp.ne.s32.totalorder %s242, %s244
      %p251 = scmp.eq.s32.totalorder %s24, 1
      %p252 = por %p250, %p251
      %p253 = scmp.ne.s32.totalorder %s244, %s245
      %p254 = scmp.eq.s32.totalorder %s24, 0
      %p255 = por %p253, %p254
      %p256 = scmp.ne.s32.totalorder %s244, %s245
      %p257 = scmp.eq.s32.totalorder %s25, 1
      %p258 = por %p256, %p257
      %p260 = scmp.ne.s32.totalorder %s245, %s259
      %p261 = scmp.eq.s32.totalorder %s25, 0
      %p262 = por %p260, %p261
      %s263 = ssub.s32 %s19, %s26
      %p264 = scmp.eq.s32.totalorder %s263, 0
      %s266 = sadd.s32 %s265, 1
      %s267 = scalar_select %p264, %s265, %s266
      %p270 = pneg %p264
      %p271 = scmp.eq.s32.totalorder %s19, 1
      %p272 = por %p270, %p271
      %p273 = scmp.ne.s32.totalorder %s265, %s268
      %p274 = scmp.eq.s32.totalorder %s19, 0
      %p275 = por %p273, %p274
      %p276 = scmp.ne.s32.totalorder %s265, %s268
      %p277 = scmp.eq.s32.totalorder %s24, 1
      %p278 = por %p276, %p277
      %p279 = scmp.ne.s32.totalorder %s268, %s269
      %p280 = scmp.eq.s32.totalorder %s24, 0
      %p281 = por %p279, %p280
      %p282 = scmp.ne.s32.totalorder %s268, %s269
      %p283 = scmp.eq.s32.totalorder %s25, 1
      %p284 = por %p282, %p283
      %p286 = scmp.ne.s32.totalorder %s269, %s285
      %p287 = scmp.eq.s32.totalorder %s25, 0
      %p288 = por %p286, %p287
      %p289 = scmp.le.s32.totalorder 1, %s19
      %p290 = scmp.lt.s32.totalorder %s19, 3
      %p291 = pnand %p289, %p290
      %p292 = pneg %p291
      // Predicated region
      $region9: #{adversarial_discriminator.1} parent=5 // pred_check
        _
      $region10: #{adversarial_discriminator.1} parent=5 // pred_check_branch
        %294 = sbr.rel (%p291) target = $region12
      $region11: #{adversarial_discriminator.1} parent=5 // pred_region
        %s295 = ssub.s32 %s19, 1
        // Predicated region
        $region13: #{adversarial_discriminator.1} parent=11 // pred_check
          %p296 = pneg %p66
        $region14: #{adversarial_discriminator.1} parent=11 // pred_check_branch
          %298 = sbr.rel (%p296) target = $region16
        $region15: #{adversarial_discriminator.1} parent=11 // pred_region
          _
        $region16: #{adversarial_discriminator.1} parent=11 // pred_fallthru
          _
        // Predicated region
        $region17: #{adversarial_discriminator.1} parent=11 // pred_check
          %p299 = pneg %p87
        $region18: #{adversarial_discriminator.1} parent=11 // pred_check_branch
          %301 = sbr.rel (%p299) target = $region20
        $region19: #{adversarial_discriminator.1} parent=11 // pred_region
          _
        $region20: #{adversarial_discriminator.1} parent=11 // pred_fallthru
          _
        // Predicated region
        $region21: #{adversarial_discriminator.1} parent=11 // pred_check
          %p302 = pneg %p108
        $region22: #{adversarial_discriminator.1} parent=11 // pred_check_branch
          %304 = sbr.rel (%p302) target = $region24
        $region23: #{adversarial_discriminator.1} parent=11 // pred_region
          _
        $region24: #{adversarial_discriminator.1} parent=11 // pred_fallthru
          _
        // Predicated region
        $region25: #{adversarial_discriminator.1} parent=11 // pred_check
          %p305 = pneg %p129
        $region26: #{adversarial_discriminator.1} parent=11 // pred_check_branch
          %307 = sbr.rel (%p305) target = $region28
        $region27: #{adversarial_discriminator.1} parent=11 // pred_region
          _
        $region28: #{adversarial_discriminator.1} parent=11 // pred_fallthru
          _
        // Predicated region
        $region29: #{adversarial_discriminator.1} parent=11 // pred_check
          %p308 = pneg %p150
        $region30: #{adversarial_discriminator.1} parent=11 // pred_check_branch
          %310 = sbr.rel (%p308) target = $region32
        $region31: #{adversarial_discriminator.1} parent=11 // pred_region
          %s312 = ssub.s32 1024, 1024
          %313 = vsyncadd [#allocation3], %s312
          %s314 = sshll.u32 [#allocation2], 4
          %s315 = int_to_ptr.vmem [resolvable:$true] %s314
          %320 = dma.hbm_to_vmem [thread:$0]  %s5, 1024, %s315, [#allocation3], 64, 64, 4
        $region32: #{adversarial_discriminator.1} parent=11 // pred_fallthru
          _
        // Predicated region
        $region33: #{adversarial_discriminator.1} parent=11 // pred_check
          %p321 = pneg %p171
        $region34: #{adversarial_discriminator.1} parent=11 // pred_check_branch
          %323 = sbr.rel (%p321) target = $region36
        $region35: #{adversarial_discriminator.1} parent=11 // pred_region
          _
        $region36: #{adversarial_discriminator.1} parent=11 // pred_fallthru
          _
        // Predicated region
        $region37: #{adversarial_discriminator.1} parent=11 // pred_check
          %p324 = pneg %p192
        $region38: #{adversarial_discriminator.1} parent=11 // pred_check_branch
          %326 = sbr.rel (%p324) target = $region40
        $region39: #{adversarial_discriminator.1} parent=11 // pred_region
          _
        $region40: #{adversarial_discriminator.1} parent=11 // pred_fallthru
          _
        // Predicated region
        $region41: #{adversarial_discriminator.1} parent=11 // pred_check
          %p327 = pneg %p213
        $region42: #{adversarial_discriminator.1} parent=11 // pred_check_branch
          %329 = sbr.rel (%p327) target = $region44
        $region43: #{adversarial_discriminator.1} parent=11 // pred_region
          _
        $region44: #{adversarial_discriminator.1} parent=11 // pred_fallthru
          _
        // Predicated region
        $region45: #{adversarial_discriminator.1} parent=11 // pred_check
          %p330 = pneg %p234
        $region46: #{adversarial_discriminator.1} parent=11 // pred_check_branch
          %332 = sbr.rel (%p330) target = $region48
        $region47: #{adversarial_discriminator.1} parent=11 // pred_region
          %s334 = ssub.s32 1024, 1024
          %335 = vsyncadd [#allocation5], %s334
          %s336 = sshll.u32 [#allocation4], 4
          %s337 = int_to_ptr.vmem [resolvable:$true] %s336
          %342 = dma.hbm_to_vmem [thread:$0]  %s9, 1024, %s337, [#allocation5], 64, 64, 4
        $region48: #{adversarial_discriminator.1} parent=11 // pred_fallthru
          _
        // Predicated region
        $region49: #{adversarial_discriminator.1} parent=11 // pred_check
          %p343 = pneg %p255
        $region50: #{adversarial_discriminator.1} parent=11 // pred_check_branch
          %345 = sbr.rel (%p343) target = $region52
        $region51: #{adversarial_discriminator.1} parent=11 // pred_region
          _
        $region52: #{adversarial_discriminator.1} parent=11 // pred_fallthru
          _
      $region12: #{adversarial_discriminator.1} parent=5 // pred_fallthru
        _
      %p346 = scmp.lt.s32.totalorder %s19, 2
      // Predicated region
      $region53: #{adversarial_discriminator.1} parent=5 // pred_check
        %p347 = pneg %p346
      $region54: #{adversarial_discriminator.1} parent=5 // pred_check_branch
        %349 = sbr.rel (%p347) target = $region56
      $region55: #{adversarial_discriminator.1} parent=5 // pred_region
        // Predicated region
        $region57: #{adversarial_discriminator.1} parent=55 // pred_check
          %p350 = pneg %p39
        $region58: #{adversarial_discriminator.1} parent=55 // pred_check_branch
          %352 = sbr.rel (%p350) target = $region60
        $region59: #{adversarial_discriminator.1} parent=55 // pred_region
          %s353 = smul.u32 2, %s19
          %p354 = scmp.lt.s32.totalorder %s353, 3
          %s355 = scalar_select %p354, %s353, 3
          %s356 = smul.addr %s355, 8
          %s357 = scalar_lea.vmem %s0, %s356
          %s358 = smul.u32 2, %s19
        $region60: #{adversarial_discriminator.1} parent=55 // pred_fallthru
          _
      $region56: #{adversarial_discriminator.1} parent=5 // pred_fallthru
        _
      %p359 = scmp.le.s32.totalorder 1, %s19
      %p360 = scmp.lt.s32.totalorder %s19, 3
      %p361 = pnand %p359, %p360
      %p362 = pneg %p361
      // Predicated region
      $region61: #{adversarial_discriminator.1} parent=5 // pred_check
        _
      $region62: #{adversarial_discriminator.1} parent=5 // pred_check_branch
        %364 = sbr.rel (%p361) target = $region64
      $region63: #{adversarial_discriminator.1} parent=5 // pred_region
        %s365 = ssub.s32 %s19, 1
        // Predicated region
        $region65: #{adversarial_discriminator.1} parent=63 // pred_check
          %p366 = pneg %p150
        $region66: #{adversarial_discriminator.1} parent=63 // pred_check_branch
          %368 = sbr.rel (%p366) target = $region68
        $region67: #{adversarial_discriminator.1} parent=63 // pred_region
          %369 = dma.done [#allocation3], 1024
        $region68: #{adversarial_discriminator.1} parent=63 // pred_fallthru
          _
        // Predicated region
        $region69: #{adversarial_discriminator.1} parent=63 // pred_check
          %p370 = pneg %p234
        $region70: #{adversarial_discriminator.1} parent=63 // pred_check_branch
          %372 = sbr.rel (%p370) target = $region72
        $region71: #{adversarial_discriminator.1} parent=63 // pred_region
          %373 = dma.done [#allocation5], 1024
        $region72: #{adversarial_discriminator.1} parent=63 // pred_fallthru
          _
        %s374 = smul.u32 2, %s24
        %p375 = scmp.lt.s32.totalorder %s374, 3
        %s376 = scalar_select %p375, %s374, 3
        %s377 = smul.addr %s376, 8
        %s378 = scalar_lea.vmem %s0, %s377
        %p379 = pneg %p45
        %p380 = pneg %p42
        %p381 = pneg %p66
        %p382 = pneg %p63
        %p383 = pneg %p87
        %p384 = pneg %p84
        %p385 = pneg %p108
        %p386 = pneg %p105
        %p387 = pneg %p129
        %p388 = pneg %p126
        %p389 = pneg %p150
        %p390 = pneg %p147
        %p391 = pneg %p171
        %p392 = pneg %p168
        %p393 = pneg %p192
        %p394 = pneg %p189
        %p395 = pneg %p213
        %p396 = pneg %p210
        %p397 = pneg %p234
        %p398 = pneg %p231
        %p399 = pneg %p255
        %p400 = pneg %p252
        %p401 = pneg %p281
        %p402 = pneg %p278
        %s403 = smul.u32 2, %s24
        %p404 = scmp.lt.s32.totalorder %s403, 3
        %s405 = scalar_select %p404, %s403, 3
        %s406 = smul.addr %s405, 4
        %s407 = scalar_lea.vmem %s11, %s406
        %s408 = smul.u32 2, %s24
        %p409 = scmp.lt.s32.totalorder %s408, 3
        %s410 = scalar_select %p409, %s408, 3
        %s411 = smul.addr %s410, 8
        %s412 = scalar_lea.vmem %s0, %s411
        %s413 = smul.u32 2, %s24
        %s414 = smul.u32 2, %s24
        %p415 = scmp.lt.s32.totalorder %s414, 3
        %s416 = scalar_select %p415, %s414, 3
        %s417 = smul.addr %s416, 4
        %s418 = scalar_lea.vmem %s11, %s417
        %s419 = smul.u32 2, %s24
        %v421 = vld [vmem:[%s412] sm:$0xff]
        %v422 = vpack.c.bf16 %v421, %v421
        %v423 = vld [vmem:[%s1] sm:$0xf]
        %v424 = vld [vmem:[%s1 + $0x4] sm:$0xf]
        %v425 = vld [vmem:[%s1 + $0x8] sm:$0xf]
        %v426 = vld [vmem:[%s1 + $0xc] sm:$0xf]
        %v427 = vld [vmem:[%s1 + $0x10] sm:$0xf]
        %v428 = vld [vmem:[%s1 + $0x14] sm:$0xf]
        %v429 = vld [vmem:[%s1 + $0x18] sm:$0xf]
        %v430 = vld [vmem:[%s1 + $0x1c] sm:$0xf]
        %v431 = vld [vmem:[%s1 + $0x20] sm:$0xf]
        %v432 = vld [vmem:[%s1 + $0x24] sm:$0xf]
        %v433 = vld [vmem:[%s1 + $0x28] sm:$0xf]
        %v434 = vld [vmem:[%s1 + $0x2c] sm:$0xf]
        %v435 = vld [vmem:[%s1 + $0x30] sm:$0xf]
        %v436 = vld [vmem:[%s1 + $0x34] sm:$0xf]
        %v437 = vld [vmem:[%s1 + $0x38] sm:$0xf]
        %v438 = vld [vmem:[%s1 + $0x3c] sm:$0xf]
        %v439 = vld [vmem:[%s2] sm:$0x1]
        %v441 = vlaneseq
        %v442 = vshrl.u32 %v441, 7
        %v443 = vsub.s32 0, %v442
        %v444 = vrot.slane %v439, %v443
        %v462 = vunpack.c.l.b16 %v423
        %v463 = vunpack.c.l.b16 %v424
        %v464 = vunpack.c.l.b16 %v425
        %v465 = vunpack.c.l.b16 %v426
        %v466 = vunpack.c.l.b16 %v427
        %v467 = vunpack.c.l.b16 %v428
        %v468 = vunpack.c.l.b16 %v429
        %v469 = vunpack.c.l.b16 %v430
        %v470 = vunpack.c.l.b16 %v431
        %v471 = vunpack.c.l.b16 %v432
        %v472 = vunpack.c.l.b16 %v433
        %v473 = vunpack.c.l.b16 %v434
        %v474 = vunpack.c.l.b16 %v435
        %v475 = vunpack.c.l.b16 %v436
        %v476 = vunpack.c.l.b16 %v437
        %v477 = vunpack.c.l.b16 %v438
        %v478 = vpack.c.b16 %v463, %v462
        %v479 = vpack.c.b16 %v465, %v464
        %v480 = vpack.c.b16 %v467, %v466
        %v481 = vpack.c.b16 %v469, %v468
        %v482 = vpack.c.b16 %v471, %v470
        %v483 = vpack.c.b16 %v473, %v472
        %v484 = vpack.c.b16 %v475, %v474
        %v485 = vpack.c.b16 %v477, %v476
        %494 = vmatprep.subr.bf16.mxu0 0
        %495 = vmatpush1.bf16.msra.mxu0 %v478
        %496 = vmatprep.subr.bf16.mxu0 0
        %497 = vmatpush1.bf16.msra.mxu0 %v479
        %498 = vmatprep.subr.bf16.mxu0 0
        %499 = vmatpush1.bf16.msra.mxu0 %v480
        %500 = vmatprep.subr.bf16.mxu0 0
        %501 = vmatpush1.bf16.msra.mxu0 %v481
        %502 = vmatprep.subr.bf16.mxu0 0
        %503 = vmatpush1.bf16.msra.mxu0 %v482
        %504 = vmatprep.subr.bf16.mxu0 0
        %505 = vmatpush1.bf16.msra.mxu0 %v483
        %506 = vmatprep.subr.bf16.mxu0 0
        %507 = vmatpush1.bf16.msra.mxu0 %v484
        %508 = vmatprep.subr.bf16.mxu0 0
        %509 = vmatpush1.bf16.msra.mxu0 %v485
        %510 = vmatprep.subr.bf16.mxu0 0
        %511 = vmatpush1.bf16.msra.mxu0 0
        %512 = vmatprep.subr.bf16.mxu0 0
        %513 = vmatpush1.bf16.msra.mxu0 0
        %514 = vmatprep.subr.bf16.mxu0 0
        %515 = vmatpush1.bf16.msra.mxu0 0
        %516 = vmatprep.subr.bf16.mxu0 0
        %517 = vmatpush1.bf16.msra.mxu0 0
        %518 = vmatprep.subr.bf16.mxu0 0
        %519 = vmatpush1.bf16.msra.mxu0 0
        %520 = vmatprep.subr.bf16.mxu0 0
        %521 = vmatpush1.bf16.msra.mxu0 0
        %522 = vmatprep.subr.bf16.mxu0 0
        %523 = vmatpush1.bf16.msra.mxu0 0
        %524 = vmatprep.subr.bf16.mxu0 0
        %525 = vmatpush1.bf16.msra.mxu0 0
        %526 = vmatprep.mubr.bf16.mxu0 0
        %527 = vmatmul.mubr.bf16.gmra.mrb[0].mxu0 %v422
        %v528 = vpop.f32.mrb[0].mxu0
        %v529 = vadd.f32 %v444, %v528
        %v530 = vpop.f32.mrb[0].mxu0
        %v531 = vpop.f32.mrb[0].mxu0
        %v532 = vpop.f32.mrb[0].mxu0
        %533 = vdwg.mxu0
        %vm534 = vcmp.gt.f32.partialorder %v529, 0.0
        %v535 = vmul.f32 %v529, 0.01
        %v536 = vsel %vm534, %v529, %v535
        %537 = vadd.xlane.f32.xlu0 %v536
        %v538 = vpop.xlane.xlu0 %537
        %v539 = vrcp.pop 128.0
        %v540 = vmul.f32 %v538, %v539
        %v541 = vmul.f32 %v536, %v536
        %542 = vadd.xlane.f32.xlu0 %v541
        %v543 = vpop.xlane.xlu0 %542
        %v544 = vmul.f32 %v543, %v539
        %v545 = vmul.f32 %v540, %v540
        %v546 = vsub.f32 %v544, %v545
        %v547 = vmax.f32 %v546, 0.0
        %v548 = vsub.f32 %v536, %v540
        %v549 = vadd.f32 %v547, 1e-05
        %v550 = vrsqrt.pop %v549
        %v551 = vmul.f32 %v548, %v550
        %v552 = vld [vmem:[%s3] sm:$0x1]
        %v554 = vlaneseq
        %v555 = vshrl.u32 %v554, 7
        %v556 = vsub.s32 0, %v555
        %v557 = vrot.slane %v552, %v556
        %v559 = vmul.f32 %v551, %v557
        %v560 = vld [vmem:[%s4] sm:$0x1]
        %v562 = vlaneseq
        %v563 = vshrl.u32 %v562, 7
        %v564 = vsub.s32 0, %v563
        %v565 = vrot.slane %v560, %v564
        %v567 = vadd.f32 %v559, %v565
        %v568 = vpack.c.bf16 %v567, %v567
        %v569 = vld [vmem:[#allocation2] sm:$0xf]
        %v570 = vld [vmem:[#allocation2 + $0x4] sm:$0xf]
        %v571 = vld [vmem:[#allocation2 + $0x8] sm:$0xf]
        %v572 = vld [vmem:[#allocation2 + $0xc] sm:$0xf]
        %v573 = vld [vmem:[#allocation2 + $0x10] sm:$0xf]
        %v574 = vld [vmem:[#allocation2 + $0x14] sm:$0xf]
        %v575 = vld [vmem:[#allocation2 + $0x18] sm:$0xf]
        %v576 = vld [vmem:[#allocation2 + $0x1c] sm:$0xf]
        %v577 = vld [vmem:[#allocation2 + $0x20] sm:$0xf]
        %v578 = vld [vmem:[#allocation2 + $0x24] sm:$0xf]
        %v579 = vld [vmem:[#allocation2 + $0x28] sm:$0xf]
        %v580 = vld [vmem:[#allocation2 + $0x2c] sm:$0xf]
        %v581 = vld [vmem:[#allocation2 + $0x30] sm:$0xf]
        %v582 = vld [vmem:[#allocation2 + $0x34] sm:$0xf]
        %v583 = vld [vmem:[#allocation2 + $0x38] sm:$0xf]
        %v584 = vld [vmem:[#allocation2 + $0x3c] sm:$0xf]
        %v585 = vld [vmem:[%s6] sm:$0x1]
        %v587 = vlaneseq
        %v588 = vshrl.u32 %v587, 7
        %v589 = vsub.s32 0, %v588
        %v590 = vrot.slane %v585, %v589
        %v608 = vunpack.c.l.b16 %v569
        %v609 = vunpack.c.l.b16 %v570
        %v610 = vunpack.c.l.b16 %v571
        %v611 = vunpack.c.l.b16 %v572
        %v612 = vunpack.c.l.b16 %v573
        %v613 = vunpack.c.l.b16 %v574
        %v614 = vunpack.c.l.b16 %v575
        %v615 = vunpack.c.l.b16 %v576
        %v616 = vunpack.c.l.b16 %v577
        %v617 = vunpack.c.l.b16 %v578
        %v618 = vunpack.c.l.b16 %v579
        %v619 = vunpack.c.l.b16 %v580
        %v620 = vunpack.c.l.b16 %v581
        %v621 = vunpack.c.l.b16 %v582
        %v622 = vunpack.c.l.b16 %v583
        %v623 = vunpack.c.l.b16 %v584
        %v624 = vpack.c.b16 %v609, %v608
        %v625 = vpack.c.b16 %v611, %v610
        %v626 = vpack.c.b16 %v613, %v612
        %v627 = vpack.c.b16 %v615, %v614
        %v628 = vpack.c.b16 %v617, %v616
        %v629 = vpack.c.b16 %v619, %v618
        %v630 = vpack.c.b16 %v621, %v620
        %v631 = vpack.c.b16 %v623, %v622
        %640 = vmatprep.subr.bf16.mxu0 0
        %641 = vmatpush1.bf16.msra.mxu0 %v624
        %642 = vmatprep.subr.bf16.mxu0 0
        %643 = vmatpush1.bf16.msra.mxu0 %v625
        %644 = vmatprep.subr.bf16.mxu0 0
        %645 = vmatpush1.bf16.msra.mxu0 %v626
        %646 = vmatprep.subr.bf16.mxu0 0
        %647 = vmatpush1.bf16.msra.mxu0 %v627
        %648 = vmatprep.subr.bf16.mxu0 0
        %649 = vmatpush1.bf16.msra.mxu0 %v628
        %650 = vmatprep.subr.bf16.mxu0 0
        %651 = vmatpush1.bf16.msra.mxu0 %v629
        %652 = vmatprep.subr.bf16.mxu0 0
        %653 = vmatpush1.bf16.msra.mxu0 %v630
        %654 = vmatprep.subr.bf16.mxu0 0
        %655 = vmatpush1.bf16.msra.mxu0 %v631
        %656 = vmatprep.subr.bf16.mxu0 0
        %657 = vmatpush1.bf16.msra.mxu0 0
        %658 = vmatprep.subr.bf16.mxu0 0
        %659 = vmatpush1.bf16.msra.mxu0 0
        %660 = vmatprep.subr.bf16.mxu0 0
        %661 = vmatpush1.bf16.msra.mxu0 0
        %662 = vmatprep.subr.bf16.mxu0 0
        %663 = vmatpush1.bf16.msra.mxu0 0
        %664 = vmatprep.subr.bf16.mxu0 0
        %665 = vmatpush1.bf16.msra.mxu0 0
        %666 = vmatprep.subr.bf16.mxu0 0
        %667 = vmatpush1.bf16.msra.mxu0 0
        %668 = vmatprep.subr.bf16.mxu0 0
        %669 = vmatpush1.bf16.msra.mxu0 0
        %670 = vmatprep.subr.bf16.mxu0 0
        %671 = vmatpush1.bf16.msra.mxu0 0
        %672 = vmatprep.mubr.bf16.mxu0 0
        %673 = vmatmul.mubr.bf16.gmra.mrb[0].mxu0 %v568
        %v674 = vpop.f32.mrb[0].mxu0
        %v675 = vadd.f32 %v590, %v674
        %v676 = vpop.f32.mrb[0].mxu0
        %v677 = vpop.f32.mrb[0].mxu0
        %v678 = vpop.f32.mrb[0].mxu0
        %679 = vdwg.mxu0
        %vm680 = vcmp.gt.f32.partialorder %v675, 0.0
        %v681 = vmul.f32 %v675, 0.01
        %v682 = vsel %vm680, %v675, %v681
        %683 = vadd.xlane.f32.xlu0 %v682
        %v684 = vpop.xlane.xlu0 %683
        %v685 = vmul.f32 %v684, %v539
        %v686 = vmul.f32 %v682, %v682
        %687 = vadd.xlane.f32.xlu0 %v686
        %v688 = vpop.xlane.xlu0 %687
        %v689 = vmul.f32 %v688, %v539
        %v690 = vmul.f32 %v685, %v685
        %v691 = vsub.f32 %v689, %v690
        %v692 = vmax.f32 %v691, 0.0
        %v693 = vsub.f32 %v682, %v685
        %v694 = vadd.f32 %v692, 1e-05
        %v695 = vrsqrt.pop %v694
        %v696 = vmul.f32 %v693, %v695
        %v697 = vld [vmem:[%s7] sm:$0x1]
        %v699 = vlaneseq
        %v700 = vshrl.u32 %v699, 7
        %v701 = vsub.s32 0, %v700
        %v702 = vrot.slane %v697, %v701
        %v704 = vmul.f32 %v696, %v702
        %v705 = vld [vmem:[%s8] sm:$0x1]
        %v707 = vlaneseq
        %v708 = vshrl.u32 %v707, 7
        %v709 = vsub.s32 0, %v708
        %v710 = vrot.slane %v705, %v709
        %v712 = vadd.f32 %v704, %v710
        %v713 = vpack.c.bf16 %v712, %v712
        %v714 = vld [vmem:[#allocation4] sm:$0xf]
        %v715 = vld [vmem:[#allocation4 + $0x4] sm:$0xf]
        %v716 = vld [vmem:[#allocation4 + $0x8] sm:$0xf]
        %v717 = vld [vmem:[#allocation4 + $0xc] sm:$0xf]
        %v718 = vld [vmem:[#allocation4 + $0x10] sm:$0xf]
        %v719 = vld [vmem:[#allocation4 + $0x14] sm:$0xf]
        %v720 = vld [vmem:[#allocation4 + $0x18] sm:$0xf]
        %v721 = vld [vmem:[#allocation4 + $0x1c] sm:$0xf]
        %v722 = vld [vmem:[#allocation4 + $0x20] sm:$0xf]
        %v723 = vld [vmem:[#allocation4 + $0x24] sm:$0xf]
        %v724 = vld [vmem:[#allocation4 + $0x28] sm:$0xf]
        %v725 = vld [vmem:[#allocation4 + $0x2c] sm:$0xf]
        %v726 = vld [vmem:[#allocation4 + $0x30] sm:$0xf]
        %v727 = vld [vmem:[#allocation4 + $0x34] sm:$0xf]
        %v728 = vld [vmem:[#allocation4 + $0x38] sm:$0xf]
        %v729 = vld [vmem:[#allocation4 + $0x3c] sm:$0xf]
        %v730 = vld [vmem:[%s10] sm:$0x1]
        %v732 = vlaneseq
        %v733 = vshrl.u32 %v732, 7
        %v734 = vsub.s32 0, %v733
        %v735 = vrot.slane %v730, %v734
        %v753 = vunpack.c.l.b16 %v714
        %v754 = vunpack.c.l.b16 %v715
        %v755 = vunpack.c.l.b16 %v716
        %v756 = vunpack.c.l.b16 %v717
        %v757 = vunpack.c.l.b16 %v718
        %v758 = vunpack.c.l.b16 %v719
        %v759 = vunpack.c.l.b16 %v720
        %v760 = vunpack.c.l.b16 %v721
        %v761 = vunpack.c.l.b16 %v722
        %v762 = vunpack.c.l.b16 %v723
        %v763 = vunpack.c.l.b16 %v724
        %v764 = vunpack.c.l.b16 %v725
        %v765 = vunpack.c.l.b16 %v726
        %v766 = vunpack.c.l.b16 %v727
        %v767 = vunpack.c.l.b16 %v728
        %v768 = vunpack.c.l.b16 %v729
        %v769 = vpack.c.b16 %v754, %v753
        %v770 = vpack.c.b16 %v756, %v755
        %v771 = vpack.c.b16 %v758, %v757
        %v772 = vpack.c.b16 %v760, %v759
        %v773 = vpack.c.b16 %v762, %v761
        %v774 = vpack.c.b16 %v764, %v763
        %v775 = vpack.c.b16 %v766, %v765
        %v776 = vpack.c.b16 %v768, %v767
        %785 = vmatprep.subr.bf16.mxu0 0
        %786 = vmatpush1.bf16.msra.mxu0 %v769
        %787 = vmatprep.subr.bf16.mxu0 0
        %788 = vmatpush1.bf16.msra.mxu0 %v770
        %789 = vmatprep.subr.bf16.mxu0 0
        %790 = vmatpush1.bf16.msra.mxu0 %v771
        %791 = vmatprep.subr.bf16.mxu0 0
        %792 = vmatpush1.bf16.msra.mxu0 %v772
        %793 = vmatprep.subr.bf16.mxu0 0
        %794 = vmatpush1.bf16.msra.mxu0 %v773
        %795 = vmatprep.subr.bf16.mxu0 0
        %796 = vmatpush1.bf16.msra.mxu0 %v774
        %797 = vmatprep.subr.bf16.mxu0 0
        %798 = vmatpush1.bf16.msra.mxu0 %v775
        %799 = vmatprep.subr.bf16.mxu0 0
        %800 = vmatpush1.bf16.msra.mxu0 %v776
        %801 = vmatprep.subr.bf16.mxu0 0
        %802 = vmatpush1.bf16.msra.mxu0 0
        %803 = vmatprep.subr.bf16.mxu0 0
        %804 = vmatpush1.bf16.msra.mxu0 0
        %805 = vmatprep.subr.bf16.mxu0 0
        %806 = vmatpush1.bf16.msra.mxu0 0
        %807 = vmatprep.subr.bf16.mxu0 0
        %808 = vmatpush1.bf16.msra.mxu0 0
        %809 = vmatprep.subr.bf16.mxu0 0
        %810 = vmatpush1.bf16.msra.mxu0 0
        %811 = vmatprep.subr.bf16.mxu0 0
        %812 = vmatpush1.bf16.msra.mxu0 0
        %813 = vmatprep.subr.bf16.mxu0 0
        %814 = vmatpush1.bf16.msra.mxu0 0
        %815 = vmatprep.subr.bf16.mxu0 0
        %816 = vmatpush1.bf16.msra.mxu0 0
        %817 = vmatprep.mubr.bf16.mxu0 0
        %818 = vmatmul.mubr.bf16.gmra.mrb[0].mxu0 %v713
        %v819 = vpop.f32.mrb[0].mxu0
        %v820 = vadd.f32 %v735, %v819
        %v821 = vpop.f32.mrb[0].mxu0
        %v822 = vpop.f32.mrb[0].mxu0
        %v823 = vpop.f32.mrb[0].mxu0
        %824 = vdwg.mxu0
        %v825 = vpack.c.bf16 %v820, %v820
        %826 = vst [vmem:[%s418] sm:$0xf] %v825
        %v827 = vld [vmem:[%s412 + $0x8] sm:$0xff]
        %v828 = vpack.c.bf16 %v827, %v827
        %v829 = vld [vmem:[%s1] sm:$0xf]
        %v830 = vld [vmem:[%s1 + $0x4] sm:$0xf]
        %v831 = vld [vmem:[%s1 + $0x8] sm:$0xf]
        %v832 = vld [vmem:[%s1 + $0xc] sm:$0xf]
        %v833 = vld [vmem:[%s1 + $0x10] sm:$0xf]
        %v834 = vld [vmem:[%s1 + $0x14] sm:$0xf]
        %v835 = vld [vmem:[%s1 + $0x18] sm:$0xf]
        %v836 = vld [vmem:[%s1 + $0x1c] sm:$0xf]
        %v837 = vld [vmem:[%s1 + $0x20] sm:$0xf]
        %v838 = vld [vmem:[%s1 + $0x24] sm:$0xf]
        %v839 = vld [vmem:[%s1 + $0x28] sm:$0xf]
        %v840 = vld [vmem:[%s1 + $0x2c] sm:$0xf]
        %v841 = vld [vmem:[%s1 + $0x30] sm:$0xf]
        %v842 = vld [vmem:[%s1 + $0x34] sm:$0xf]
        %v843 = vld [vmem:[%s1 + $0x38] sm:$0xf]
        %v844 = vld [vmem:[%s1 + $0x3c] sm:$0xf]
        %v845 = vld [vmem:[%s2] sm:$0x1]
        %v847 = vlaneseq
        %v848 = vshrl.u32 %v847, 7
        %v849 = vsub.s32 0, %v848
        %v850 = vrot.slane %v845, %v849
        %v868 = vunpack.c.l.b16 %v829
        %v869 = vunpack.c.l.b16 %v830
        %v870 = vunpack.c.l.b16 %v831
        %v871 = vunpack.c.l.b16 %v832
        %v872 = vunpack.c.l.b16 %v833
        %v873 = vunpack.c.l.b16 %v834
        %v874 = vunpack.c.l.b16 %v835
        %v875 = vunpack.c.l.b16 %v836
        %v876 = vunpack.c.l.b16 %v837
        %v877 = vunpack.c.l.b16 %v838
        %v878 = vunpack.c.l.b16 %v839
        %v879 = vunpack.c.l.b16 %v840
        %v880 = vunpack.c.l.b16 %v841
        %v881 = vunpack.c.l.b16 %v842
        %v882 = vunpack.c.l.b16 %v843
        %v883 = vunpack.c.l.b16 %v844
        %v884 = vpack.c.b16 %v869, %v868
        %v885 = vpack.c.b16 %v871, %v870
        %v886 = vpack.c.b16 %v873, %v872
        %v887 = vpack.c.b16 %v875, %v874
        %v888 = vpack.c.b16 %v877, %v876
        %v889 = vpack.c.b16 %v879, %v878
        %v890 = vpack.c.b16 %v881, %v880
        %v891 = vpack.c.b16 %v883, %v882
        %900 = vmatprep.subr.bf16.mxu0 0
        %901 = vmatpush1.bf16.msra.mxu0 %v884
        %902 = vmatprep.subr.bf16.mxu0 0
        %903 = vmatpush1.bf16.msra.mxu0 %v885
        %904 = vmatprep.subr.bf16.mxu0 0
        %905 = vmatpush1.bf16.msra.mxu0 %v886
        %906 = vmatprep.subr.bf16.mxu0 0
        %907 = vmatpush1.bf16.msra.mxu0 %v887
        %908 = vmatprep.subr.bf16.mxu0 0
        %909 = vmatpush1.bf16.msra.mxu0 %v888
        %910 = vmatprep.subr.bf16.mxu0 0
        %911 = vmatpush1.bf16.msra.mxu0 %v889
        %912 = vmatprep.subr.bf16.mxu0 0
        %913 = vmatpush1.bf16.msra.mxu0 %v890
        %914 = vmatprep.subr.bf16.mxu0 0
        %915 = vmatpush1.bf16.msra.mxu0 %v891
        %916 = vmatprep.subr.bf16.mxu0 0
        %917 = vmatpush1.bf16.msra.mxu0 0
        %918 = vmatprep.subr.bf16.mxu0 0
        %919 = vmatpush1.bf16.msra.mxu0 0
        %920 = vmatprep.subr.bf16.mxu0 0
        %921 = vmatpush1.bf16.msra.mxu0 0
        %922 = vmatprep.subr.bf16.mxu0 0
        %923 = vmatpush1.bf16.msra.mxu0 0
        %924 = vmatprep.subr.bf16.mxu0 0
        %925 = vmatpush1.bf16.msra.mxu0 0
        %926 = vmatprep.subr.bf16.mxu0 0
        %927 = vmatpush1.bf16.msra.mxu0 0
        %928 = vmatprep.subr.bf16.mxu0 0
        %929 = vmatpush1.bf16.msra.mxu0 0
        %930 = vmatprep.subr.bf16.mxu0 0
        %931 = vmatpush1.bf16.msra.mxu0 0
        %932 = vmatprep.mubr.bf16.mxu0 0
        %933 = vmatmul.mubr.bf16.gmra.mrb[0].mxu0 %v828
        %v934 = vpop.f32.mrb[0].mxu0
        %v935 = vadd.f32 %v850, %v934
        %v936 = vpop.f32.mrb[0].mxu0
        %v937 = vpop.f32.mrb[0].mxu0
        %v938 = vpop.f32.mrb[0].mxu0
        %939 = vdwg.mxu0
        %vm940 = vcmp.gt.f32.partialorder %v935, 0.0
        %v941 = vmul.f32 %v935, 0.01
        %v942 = vsel %vm940, %v935, %v941
        %943 = vadd.xlane.f32.xlu0 %v942
        %v944 = vpop.xlane.xlu0 %943
        %v945 = vmul.f32 %v944, %v539
        %v946 = vmul.f32 %v942, %v942
        %947 = vadd.xlane.f32.xlu0 %v946
        %v948 = vpop.xlane.xlu0 %947
        %v949 = vmul.f32 %v948, %v539
        %v950 = vmul.f32 %v945, %v945
        %v951 = vsub.f32 %v949, %v950
        %v952 = vmax.f32 %v951, 0.0
        %v953 = vsub.f32 %v942, %v945
        %v954 = vadd.f32 %v952, 1e-05
        %v955 = vrsqrt.pop %v954
        %v956 = vmul.f32 %v953, %v955
        %v957 = vld [vmem:[%s3] sm:$0x1]
        %v959 = vlaneseq
        %v960 = vshrl.u32 %v959, 7
        %v961 = vsub.s32 0, %v960
        %v962 = vrot.slane %v957, %v961
        %v964 = vmul.f32 %v956, %v962
        %v965 = vld [vmem:[%s4] sm:$0x1]
        %v967 = vlaneseq
        %v968 = vshrl.u32 %v967, 7
        %v969 = vsub.s32 0, %v968
        %v970 = vrot.slane %v965, %v969
        %v972 = vadd.f32 %v964, %v970
        %v973 = vpack.c.bf16 %v972, %v972
        %v974 = vld [vmem:[#allocation2] sm:$0xf]
        %v975 = vld [vmem:[#allocation2 + $0x4] sm:$0xf]
        %v976 = vld [vmem:[#allocation2 + $0x8] sm:$0xf]
        %v977 = vld [vmem:[#allocation2 + $0xc] sm:$0xf]
        %v978 = vld [vmem:[#allocation2 + $0x10] sm:$0xf]
        %v979 = vld [vmem:[#allocation2 + $0x14] sm:$0xf]
        %v980 = vld [vmem:[#allocation2 + $0x18] sm:$0xf]
        %v981 = vld [vmem:[#allocation2 + $0x1c] sm:$0xf]
        %v982 = vld [vmem:[#allocation2 + $0x20] sm:$0xf]
        %v983 = vld [vmem:[#allocation2 + $0x24] sm:$0xf]
        %v984 = vld [vmem:[#allocation2 + $0x28] sm:$0xf]
        %v985 = vld [vmem:[#allocation2 + $0x2c] sm:$0xf]
        %v986 = vld [vmem:[#allocation2 + $0x30] sm:$0xf]
        %v987 = vld [vmem:[#allocation2 + $0x34] sm:$0xf]
        %v988 = vld [vmem:[#allocation2 + $0x38] sm:$0xf]
        %v989 = vld [vmem:[#allocation2 + $0x3c] sm:$0xf]
        %v990 = vld [vmem:[%s6] sm:$0x1]
        %v992 = vlaneseq
        %v993 = vshrl.u32 %v992, 7
        %v994 = vsub.s32 0, %v993
        %v995 = vrot.slane %v990, %v994
        %v1013 = vunpack.c.l.b16 %v974
        %v1014 = vunpack.c.l.b16 %v975
        %v1015 = vunpack.c.l.b16 %v976
        %v1016 = vunpack.c.l.b16 %v977
        %v1017 = vunpack.c.l.b16 %v978
        %v1018 = vunpack.c.l.b16 %v979
        %v1019 = vunpack.c.l.b16 %v980
        %v1020 = vunpack.c.l.b16 %v981
        %v1021 = vunpack.c.l.b16 %v982
        %v1022 = vunpack.c.l.b16 %v983
        %v1023 = vunpack.c.l.b16 %v984
        %v1024 = vunpack.c.l.b16 %v985
        %v1025 = vunpack.c.l.b16 %v986
        %v1026 = vunpack.c.l.b16 %v987
        %v1027 = vunpack.c.l.b16 %v988
        %v1028 = vunpack.c.l.b16 %v989
        %v1029 = vpack.c.b16 %v1014, %v1013
        %v1030 = vpack.c.b16 %v1016, %v1015
        %v1031 = vpack.c.b16 %v1018, %v1017
        %v1032 = vpack.c.b16 %v1020, %v1019
        %v1033 = vpack.c.b16 %v1022, %v1021
        %v1034 = vpack.c.b16 %v1024, %v1023
        %v1035 = vpack.c.b16 %v1026, %v1025
        %v1036 = vpack.c.b16 %v1028, %v1027
        %1045 = vmatprep.subr.bf16.mxu0 0
        %1046 = vmatpush1.bf16.msra.mxu0 %v1029
        %1047 = vmatprep.subr.bf16.mxu0 0
        %1048 = vmatpush1.bf16.msra.mxu0 %v1030
        %1049 = vmatprep.subr.bf16.mxu0 0
        %1050 = vmatpush1.bf16.msra.mxu0 %v1031
        %1051 = vmatprep.subr.bf16.mxu0 0
        %1052 = vmatpush1.bf16.msra.mxu0 %v1032
        %1053 = vmatprep.subr.bf16.mxu0 0
        %1054 = vmatpush1.bf16.msra.mxu0 %v1033
        %1055 = vmatprep.subr.bf16.mxu0 0
        %1056 = vmatpush1.bf16.msra.mxu0 %v1034
        %1057 = vmatprep.subr.bf16.mxu0 0
        %1058 = vmatpush1.bf16.msra.mxu0 %v1035
        %1059 = vmatprep.subr.bf16.mxu0 0
        %1060 = vmatpush1.bf16.msra.mxu0 %v1036
        %1061 = vmatprep.subr.bf16.mxu0 0
        %1062 = vmatpush1.bf16.msra.mxu0 0
        %1063 = vmatprep.subr.bf16.mxu0 0
        %1064 = vmatpush1.bf16.msra.mxu0 0
        %1065 = vmatprep.subr.bf16.mxu0 0
        %1066 = vmatpush1.bf16.msra.mxu0 0
        %1067 = vmatprep.subr.bf16.mxu0 0
        %1068 = vmatpush1.bf16.msra.mxu0 0
        %1069 = vmatprep.subr.bf16.mxu0 0
        %1070 = vmatpush1.bf16.msra.mxu0 0
        %1071 = vmatprep.subr.bf16.mxu0 0
        %1072 = vmatpush1.bf16.msra.mxu0 0
        %1073 = vmatprep.subr.bf16.mxu0 0
        %1074 = vmatpush1.bf16.msra.mxu0 0
        %1075 = vmatprep.subr.bf16.mxu0 0
        %1076 = vmatpush1.bf16.msra.mxu0 0
        %1077 = vmatprep.mubr.bf16.mxu0 0
        %1078 = vmatmul.mubr.bf16.gmra.mrb[0].mxu0 %v973
        %v1079 = vpop.f32.mrb[0].mxu0
        %v1080 = vadd.f32 %v995, %v1079
        %v1081 = vpop.f32.mrb[0].mxu0
        %v1082 = vpop.f32.mrb[0].mxu0
        %v1083 = vpop.f32.mrb[0].mxu0
        %1084 = vdwg.mxu0
        %vm1085 = vcmp.gt.f32.partialorder %v1080, 0.0
        %v1086 = vmul.f32 %v1080, 0.01
        %v1087 = vsel %vm1085, %v1080, %v1086
        %1088 = vadd.xlane.f32.xlu0 %v1087
        %v1089 = vpop.xlane.xlu0 %1088
        %v1090 = vmul.f32 %v1089, %v539
        %v1091 = vmul.f32 %v1087, %v1087
        %1092 = vadd.xlane.f32.xlu0 %v1091
        %v1093 = vpop.xlane.xlu0 %1092
        %v1094 = vmul.f32 %v1093, %v539
        %v1095 = vmul.f32 %v1090, %v1090
        %v1096 = vsub.f32 %v1094, %v1095
        %v1097 = vmax.f32 %v1096, 0.0
        %v1098 = vsub.f32 %v1087, %v1090
        %v1099 = vadd.f32 %v1097, 1e-05
        %v1100 = vrsqrt.pop %v1099
        %v1101 = vmul.f32 %v1098, %v1100
        %v1102 = vld [vmem:[%s7] sm:$0x1]
        %v1104 = vlaneseq
        %v1105 = vshrl.u32 %v1104, 7
        %v1106 = vsub.s32 0, %v1105
        %v1107 = vrot.slane %v1102, %v1106
        %v1109 = vmul.f32 %v1101, %v1107
        %v1110 = vld [vmem:[%s8] sm:$0x1]
        %v1112 = vlaneseq
        %v1113 = vshrl.u32 %v1112, 7
        %v1114 = vsub.s32 0, %v1113
        %v1115 = vrot.slane %v1110, %v1114
        %v1117 = vadd.f32 %v1109, %v1115
        %v1118 = vpack.c.bf16 %v1117, %v1117
        %v1119 = vld [vmem:[#allocation4] sm:$0xf]
        %v1120 = vld [vmem:[#allocation4 + $0x4] sm:$0xf]
        %v1121 = vld [vmem:[#allocation4 + $0x8] sm:$0xf]
        %v1122 = vld [vmem:[#allocation4 + $0xc] sm:$0xf]
        %v1123 = vld [vmem:[#allocation4 + $0x10] sm:$0xf]
        %v1124 = vld [vmem:[#allocation4 + $0x14] sm:$0xf]
        %v1125 = vld [vmem:[#allocation4 + $0x18] sm:$0xf]
        %v1126 = vld [vmem:[#allocation4 + $0x1c] sm:$0xf]
        %v1127 = vld [vmem:[#allocation4 + $0x20] sm:$0xf]
        %v1128 = vld [vmem:[#allocation4 + $0x24] sm:$0xf]
        %v1129 = vld [vmem:[#allocation4 + $0x28] sm:$0xf]
        %v1130 = vld [vmem:[#allocation4 + $0x2c] sm:$0xf]
        %v1131 = vld [vmem:[#allocation4 + $0x30] sm:$0xf]
        %v1132 = vld [vmem:[#allocation4 + $0x34] sm:$0xf]
        %v1133 = vld [vmem:[#allocation4 + $0x38] sm:$0xf]
        %v1134 = vld [vmem:[#allocation4 + $0x3c] sm:$0xf]
        %v1135 = vld [vmem:[%s10] sm:$0x1]
        %v1137 = vlaneseq
        %v1138 = vshrl.u32 %v1137, 7
        %v1139 = vsub.s32 0, %v1138
        %v1140 = vrot.slane %v1135, %v1139
        %v1158 = vunpack.c.l.b16 %v1119
        %v1159 = vunpack.c.l.b16 %v1120
        %v1160 = vunpack.c.l.b16 %v1121
        %v1161 = vunpack.c.l.b16 %v1122
        %v1162 = vunpack.c.l.b16 %v1123
        %v1163 = vunpack.c.l.b16 %v1124
        %v1164 = vunpack.c.l.b16 %v1125
        %v1165 = vunpack.c.l.b16 %v1126
        %v1166 = vunpack.c.l.b16 %v1127
        %v1167 = vunpack.c.l.b16 %v1128
        %v1168 = vunpack.c.l.b16 %v1129
        %v1169 = vunpack.c.l.b16 %v1130
        %v1170 = vunpack.c.l.b16 %v1131
        %v1171 = vunpack.c.l.b16 %v1132
        %v1172 = vunpack.c.l.b16 %v1133
        %v1173 = vunpack.c.l.b16 %v1134
        %v1174 = vpack.c.b16 %v1159, %v1158
        %v1175 = vpack.c.b16 %v1161, %v1160
        %v1176 = vpack.c.b16 %v1163, %v1162
        %v1177 = vpack.c.b16 %v1165, %v1164
        %v1178 = vpack.c.b16 %v1167, %v1166
        %v1179 = vpack.c.b16 %v1169, %v1168
        %v1180 = vpack.c.b16 %v1171, %v1170
        %v1181 = vpack.c.b16 %v1173, %v1172
        %1190 = vmatprep.subr.bf16.mxu0 0
        %1191 = vmatpush1.bf16.msra.mxu0 %v1174
        %1192 = vmatprep.subr.bf16.mxu0 0
        %1193 = vmatpush1.bf16.msra.mxu0 %v1175
        %1194 = vmatprep.subr.bf16.mxu0 0
        %1195 = vmatpush1.bf16.msra.mxu0 %v1176
        %1196 = vmatprep.subr.bf16.mxu0 0
        %1197 = vmatpush1.bf16.msra.mxu0 %v1177
        %1198 = vmatprep.subr.bf16.mxu0 0
        %1199 = vmatpush1.bf16.msra.mxu0 %v1178
        %1200 = vmatprep.subr.bf16.mxu0 0
        %1201 = vmatpush1.bf16.msra.mxu0 %v1179
        %1202 = vmatprep.subr.bf16.mxu0 0
        %1203 = vmatpush1.bf16.msra.mxu0 %v1180
        %1204 = vmatprep.subr.bf16.mxu0 0
        %1205 = vmatpush1.bf16.msra.mxu0 %v1181
        %1206 = vmatprep.subr.bf16.mxu0 0
        %1207 = vmatpush1.bf16.msra.mxu0 0
        %1208 = vmatprep.subr.bf16.mxu0 0
        %1209 = vmatpush1.bf16.msra.mxu0 0
        %1210 = vmatprep.subr.bf16.mxu0 0
        %1211 = vmatpush1.bf16.msra.mxu0 0
        %1212 = vmatprep.subr.bf16.mxu0 0
        %1213 = vmatpush1.bf16.msra.mxu0 0
        %1214 = vmatprep.subr.bf16.mxu0 0
        %1215 = vmatpush1.bf16.msra.mxu0 0
        %1216 = vmatprep.subr.bf16.mxu0 0
        %1217 = vmatpush1.bf16.msra.mxu0 0
        %1218 = vmatprep.subr.bf16.mxu0 0
        %1219 = vmatpush1.bf16.msra.mxu0 0
        %1220 = vmatprep.subr.bf16.mxu0 0
        %1221 = vmatpush1.bf16.msra.mxu0 0
        %1222 = vmatprep.mubr.bf16.mxu0 0
        %1223 = vmatmul.mubr.bf16.gmra.mrb[0].mxu0 %v1118
        %v1224 = vpop.f32.mrb[0].mxu0
        %v1225 = vadd.f32 %v1140, %v1224
        %v1226 = vpop.f32.mrb[0].mxu0
        %v1227 = vpop.f32.mrb[0].mxu0
        %v1228 = vpop.f32.mrb[0].mxu0
        %1229 = vdwg.mxu0
        %v1230 = vpack.c.bf16 %v1225, %v1225
        %1231 = vst [vmem:[%s418 + $0x4] sm:$0xf] %v1230
        %s1232 = smul.u32 2, %s24
        %p1233 = scmp.lt.s32.totalorder %s1232, 3
        %s1234 = scalar_select %p1233, %s1232, 3
        %s1235 = smul.addr %s1234, 4
        %s1236 = scalar_lea.vmem %s11, %s1235
        // Predicated region
        $region73: #{adversarial_discriminator.1} parent=63 // pred_check
          %p1237 = pneg %p278
        $region74: #{adversarial_discriminator.1} parent=63 // pred_check_branch
          %1239 = sbr.rel (%p1237) target = $region76
        $region75: #{adversarial_discriminator.1} parent=63 // pred_region
          %s1240 = smul.u32 2, %s24
        $region76: #{adversarial_discriminator.1} parent=63 // pred_fallthru
          _
      $region64: #{adversarial_discriminator.1} parent=5 // pred_fallthru
        _
      %p1241 = scmp.le.s32.totalorder 2, %s19
      // Predicated region
      $region77: #{adversarial_discriminator.1} parent=5 // pred_check
        %p1242 = pneg %p1241
      $region78: #{adversarial_discriminator.1} parent=5 // pred_check_branch
        %1244 = sbr.rel (%p1242) target = $region80
      $region79: #{adversarial_discriminator.1} parent=5 // pred_region
        %s1245 = ssub.s32 %s19, 2
        // Predicated region
        $region81: #{adversarial_discriminator.1} parent=79 // pred_check
          %p1246 = pneg %p284
        $region82: #{adversarial_discriminator.1} parent=79 // pred_check_branch
          %1248 = sbr.rel (%p1246) target = $region84
        $region83: #{adversarial_discriminator.1} parent=79 // pred_region
          %s1249 = smul.u32 2, %s25
          %p1250 = scmp.lt.s32.totalorder %s1249, 3
          %s1251 = scalar_select %p1250, %s1249, 3
          %s1252 = smul.addr %s1251, 4
          %s1253 = scalar_lea.vmem %s11, %s1252
        $region84: #{adversarial_discriminator.1} parent=79 // pred_fallthru
          _
      $region80: #{adversarial_discriminator.1} parent=5 // pred_fallthru
        _
    $region6: #{adversarial_discriminator.1} parent=1 // loop_footer
      %s23 = sadd.s32 1, %s19
    $region7: #{adversarial_discriminator.1} parent=1 // loop_footer_branch
      %18 = sbr.rel target = $region3
    $region8: #{adversarial_discriminator.1} parent=1 // loop_exit
      _
    %1254 = vsyncpa [#allocation3], 1
    %s1255 = scalar_lea.sflag [#allocation3], 1
    %1256 = vsyncpa %s1255, 1
    %1257 = vsyncpa [#allocation5], 1

</llo_original>
